<compile_context>
chip_gen: v5e
topology: v5e:2x2
jax: 0.10.0
libtpu: 0.0.40
codegen_flags: <defaults>
</compile_context>

<pallas_src>
import jax
import jax.numpy as jnp
from jax.experimental import pallas as pl
from jax.experimental.pallas import tpu as pltpu


# ----------------------------------------------------------------------------
# Fused bidirectional-LSTM + masked max-pool kernel.
# grid=(n_chunks,) over time chunks ("arbitrary" = sequential); inside each
# chunk an unrolled fori_loop walks TL time steps. (h, c) per direction and the
# running max live in VMEM scratch and carry across chunks. At global step s
# the forward direction consumes original time s and the backward direction
# consumes original time L-1-s (its gate pre-activations and mask are
# pre-reversed on the host side so both directions walk rows in order).
# ----------------------------------------------------------------------------
def _bilstm_pool_kernel(gates_ref, maskf_ref, maskb_ref, wrec_ref, o_ref,
                        h_ref, cf_ref, cb_ref, runf_ref, runb_ref):
    c = pl.program_id(0)
    TL = gates_ref.shape[0]
    H = cf_ref.shape[-1]

    @pl.when(c == 0)
    def _():
        h_ref[...] = jnp.zeros_like(h_ref)
        cf_ref[...] = jnp.zeros_like(cf_ref)
        cb_ref[...] = jnp.zeros_like(cb_ref)
        runf_ref[...] = jnp.full_like(runf_ref, -jnp.inf)
        runb_ref[...] = jnp.full_like(runb_ref, -jnp.inf)

    w_rec = wrec_ref[...]                      # (2H, 8H), loaded once per chunk

    def body(t, carry):
        # One matmul per step covering both directions (block-diagonal W_hh).
        g = gates_ref[t] + jnp.dot(h_ref[...], w_rec,
                                   preferred_element_type=jnp.float32)  # (B, 8H)
        # PyTorch gate order i, f, g, o; forward dir in lanes [0,4H), backward
        # in [4H,8H).  (Gate extraction is still a sub-128-lane slice; at
        # production H it should be padded to 128 lanes per gate.)
        i_f = jax.nn.sigmoid(g[:, 0 * H:1 * H])
        f_f = jax.nn.sigmoid(g[:, 1 * H:2 * H])
        g_f = jnp.tanh(g[:, 2 * H:3 * H])
        o_f = jax.nn.sigmoid(g[:, 3 * H:4 * H])
        i_b = jax.nn.sigmoid(g[:, 4 * H:5 * H])
        f_b = jax.nn.sigmoid(g[:, 5 * H:6 * H])
        g_b = jnp.tanh(g[:, 6 * H:7 * H])
        o_b = jax.nn.sigmoid(g[:, 7 * H:8 * H])

        c_f = f_f * cf_ref[...] + i_f * g_f
        c_b = f_b * cb_ref[...] + i_b * g_b
        h_f = o_f * jnp.tanh(c_f)
        h_b = o_b * jnp.tanh(c_b)
        cf_ref[...] = c_f
        cb_ref[...] = c_b
        h_ref[...] = jnp.concatenate([h_f, h_b], axis=-1)

        # Fused masked max-pool over time (running max, no HBM round trip).
        m_f = maskf_ref[t]                     # (B, 1), 1.0 = valid position
        m_b = maskb_ref[t]
        runf_ref[...] = jnp.where(m_f > 0.0,
                                  jnp.maximum(runf_ref[...], h_f), runf_ref[...])
        runb_ref[...] = jnp.where(m_b > 0.0,
                                  jnp.maximum(runb_ref[...], h_b), runb_ref[...])
        return carry

    jax.lax.fori_loop(0, TL, body, 0, unroll=True)

    # Output block index is constant across chunks; cheap (B, 2H) write each chunk.
    o_ref[...] = jnp.concatenate([runf_ref[...], runb_ref[...]], axis=-1)


def bilstm_maxpool_pallas(x_bld, mask, params):
    """(B, L, D) embeddings + (B, L) mask -> masked-max-pooled (B, 2H)."""
    B, L, D = x_bld.shape
    H = params['w_hh_f'].shape[1]
    G = 4 * H

    # --- input projection hoisted out of the recurrence (one big matmul) -----
    w_in = jnp.concatenate([params['w_ih_f'].T, params['w_ih_b'].T], axis=1)   # (D, 8H)
    b_in = jnp.concatenate([params['b_ih_f'] + params['b_hh_f'],
                            params['b_ih_b'] + params['b_hh_b']])              # (8H,)
    x_t = jnp.transpose(x_bld, (1, 0, 2))                                      # (L, B, D)
    gi = (jnp.dot(x_t.reshape(L * B, D), w_in,
                  preferred_element_type=jnp.float32) + b_in).reshape(L, B, 2 * G)
    # Backward direction consumes time-reversed inputs -> pre-reverse its half.
    gates_in = jnp.concatenate([gi[:, :, :G], gi[::-1, :, G:]], axis=-1)       # (L, B, 8H)

    # --- block-diagonal recurrent weight: one matmul per step, both dirs -----
    w_rec = jnp.zeros((2 * H, 2 * G), jnp.float32)
    w_rec = w_rec.at[:H, :G].set(params['w_hh_f'].T)
    w_rec = w_rec.at[H:, G:].set(params['w_hh_b'].T)

    mask_t = jnp.transpose(mask.astype(jnp.float32), (1, 0))[:, :, None]       # (L, B, 1)
    mask_f = mask_t
    mask_b = mask_t[::-1]

    # Time-chunk size for the grid axis; in-kernel fori_loop covers each chunk.
    TL = L
    for cand in (16, 8):
        if L > cand and L % cand == 0:
            TL = cand
            break
    n_chunks = L // TL

    grid_spec = pltpu.PrefetchScalarGridSpec(
        num_scalar_prefetch=0,
        grid=(n_chunks,),
        in_specs=[
            pl.BlockSpec((TL, B, 2 * G), lambda c: (c, 0, 0)),   # gate pre-activations
            pl.BlockSpec((TL, B, 1), lambda c: (c, 0, 0)),       # forward mask
            pl.BlockSpec((TL, B, 1), lambda c: (c, 0, 0)),       # backward (reversed) mask
            pl.BlockSpec((2 * H, 2 * G), lambda c: (0, 0)),      # recurrent weights
        ],
        out_specs=pl.BlockSpec((B, 2 * H), lambda c: (0, 0)),
        scratch_shapes=[
            pltpu.VMEM((B, 2 * H), jnp.float32),   # h = [h_f || h_b]
            pltpu.VMEM((B, H), jnp.float32),       # c_f
            pltpu.VMEM((B, H), jnp.float32),       # c_b
            pltpu.VMEM((B, H), jnp.float32),       # running max (forward)
            pltpu.VMEM((B, H), jnp.float32),       # running max (backward)
        ],
    )
    return pl.pallas_call(
        _bilstm_pool_kernel,
        out_shape=jax.ShapeDtypeStruct((B, 2 * H), jnp.float32),
        grid_spec=grid_spec,
        compiler_params=pltpu.CompilerParams(dimension_semantics=("arbitrary",)),
    )(gates_in, mask_f, mask_b, w_rec)


# ----------------------------------------------------------------------------
# Glue: embedding lookup, local window gather, concat (plain JAX, memory-bound).
# ----------------------------------------------------------------------------
def retrieve_local_embeddings(embed, anchors, window):
    """JAX equivalent of retrieveLocalEmbeddings: (B, L, D) -> (B, (2W+1)*D)."""
    B, L, D = embed.shape
    zeros = jnp.zeros((B, window, D), embed.dtype)
    padded = jnp.concatenate([zeros, embed, zeros], axis=1)          # (B, L+2W, D)
    ids = anchors[:, None].astype(jnp.int32) + jnp.arange(
        2 * window + 1, dtype=jnp.int32)[None, :]
    local = jnp.take_along_axis(padded, ids[:, :, None], axis=1)     # (B, 2W+1, D)
    return local.reshape(B, -1)


def lstm_forward(token_ids, anchors, mask, embed_table, params, window):
    embed = jnp.take(embed_table, token_ids, axis=0)                 # (B, L, D)
    rnn_rep = bilstm_maxpool_pallas(embed, mask, params)             # (B, 2H)
    local = retrieve_local_embeddings(embed, anchors, window)        # (B, (2W+1)*D)
    frep = jnp.concatenate([rnn_rep, local], axis=1)
    # dropout is identity at inference; self.fc is never applied in forward().
    return frep


# ----------------------------------------------------------------------------
# Pure-JAX reference (lax.scan LSTM) for a sanity check.
# ----------------------------------------------------------------------------
def _lstm_ref_dir(x, w_ih, w_hh, b_ih, b_hh):
    B, L, D = x.shape
    H = w_hh.shape[1]

    def step(carry, x_t):
        h, c = carry
        gates = x_t @ w_ih.T + b_ih + h @ w_hh.T + b_hh
        i, f, g, o = jnp.split(gates, 4, axis=-1)
        c = jax.nn.sigmoid(f) * c + jax.nn.sigmoid(i) * jnp.tanh(g)
        h = jax.nn.sigmoid(o) * jnp.tanh(c)
        return (h, c), h

    init = (jnp.zeros((B, H), jnp.float32), jnp.zeros((B, H), jnp.float32))
    _, hs = jax.lax.scan(step, init, jnp.transpose(x, (1, 0, 2)))
    return jnp.transpose(hs, (1, 0, 2))


if __name__ == "__main__":
    B, L, D, H, W, V = 8, 8, 32, 32, 2, 50   # batch, seq, embed, hidden, window, vocab

    key = jax.random.PRNGKey(0)
    ks = jax.random.split(key, 12)
    scale = 1.0 / jnp.sqrt(jnp.float32(H))
    u = lambda k, shape: jax.random.uniform(k, shape, jnp.float32, -scale, scale)

    params = {
        'w_ih_f': u(ks[0], (4 * H, D)), 'w_hh_f': u(ks[1], (4 * H, H)),
        'b_ih_f': u(ks[2], (4 * H,)),   'b_hh_f': u(ks[3], (4 * H,)),
        'w_ih_b': u(ks[4], (4 * H, D)), 'w_hh_b': u(ks[5], (4 * H, H)),
        'b_ih_b': u(ks[6], (4 * H,)),   'b_hh_b': u(ks[7], (4 * H,)),
    }
    embed_table = jax.random.normal(ks[8], (V, D), jnp.float32) * 0.1
    token_ids = jax.random.randint(ks[9], (B, L), 0, V)
    anchors = jax.random.randint(ks[10], (B,), 0, L)
    mask = jnp.ones((B, L), jnp.float32)          # full-length sequences

    frep = lstm_forward(token_ids, anchors, mask, embed_table, params, window=W)
    frep = jax.block_until_ready(frep)
    assert frep.shape == (B, 2 * H + (2 * W + 1) * D), frep.shape

    # Correctness sanity check vs. pure-JAX reference.
    embed = jnp.take(embed_table, token_ids, axis=0)
    out_f = _lstm_ref_dir(embed, params['w_ih_f'], params['w_hh_f'],
                          params['b_ih_f'], params['b_hh_f'])
    out_b = _lstm_ref_dir(embed[:, ::-1], params['w_ih_b'], params['w_hh_b'],
                          params['b_ih_b'], params['b_hh_b'])[:, ::-1]
    out_ref = jnp.concatenate([out_f, out_b], axis=-1)
    masked_ref = jnp.where(mask[:, :, None] > 0.0, out_ref, -jnp.inf)
    rnn_ref = jnp.max(masked_ref, axis=1)
    local_ref = retrieve_local_embeddings(embed, anchors, W)
    frep_ref = jnp.concatenate([rnn_ref, local_ref], axis=1)
    assert jnp.allclose(frep, frep_ref, atol=5e-3, rtol=5e-3), \
        float(jnp.max(jnp.abs(frep - frep_ref)))

    print("KERNEL_OK")
</pallas_src>

<mosaic_0001>
module attributes {stable_mosaic.version = 11 : i64} {
  func.func @_bilstm_pool_kernel(%arg0: i32, %arg1: memref<8x8x256xf32, #tpu.memory_space<vmem>>, %arg2: memref<8x8x1xf32, #tpu.memory_space<vmem>>, %arg3: memref<8x8x1xf32, #tpu.memory_space<vmem>>, %arg4: memref<64x256xf32, #tpu.memory_space<vmem>>, %arg5: memref<8x64xf32, #tpu.memory_space<vmem>>, %arg6: memref<8x64xf32, #tpu.memory_space<vmem>>, %arg7: memref<8x32xf32, #tpu.memory_space<vmem>>, %arg8: memref<8x32xf32, #tpu.memory_space<vmem>>, %arg9: memref<8x32xf32, #tpu.memory_space<vmem>>, %arg10: memref<8x32xf32, #tpu.memory_space<vmem>>) attributes {dimension_semantics = [#tpu.dimension_semantics<arbitrary>], iteration_bounds = array<i64: 1>, scalar_prefetch = 0 : i64, scratch_operands = 5 : i64, tpu.core_type = #tpu.core_type<tc>, window_params = [{transform_indices = @transform_0, window_bounds = array<i64: 8, 8, 256>}, {transform_indices = @transform_1, window_bounds = array<i64: 8, 8, 1>}, {transform_indices = @transform_2, window_bounds = array<i64: 8, 8, 1>}, {pipeline_mode = #tpu.pipeline_mode<synchronous>, transform_indices = @transform_3, window_bounds = array<i64: 64, 256>}, {pipeline_mode = #tpu.pipeline_mode<synchronous>, transform_indices = @transform_4, window_bounds = array<i64: 8, 64>}]} {
    %c0_i32 = arith.constant 0 : i32
    %0 = arith.cmpi eq, %arg0, %c0_i32 : i32
    %1 = arith.extui %0 : i1 to i32
    %c0_i32_0 = arith.constant 0 : i32
    %2 = arith.cmpi ne, %1, %c0_i32_0 : i32
    scf.if %2 {
      %cst_320 = arith.constant 0.000000e+00 : f32
      %696 = vector.broadcast %cst_320 : f32 to vector<8x64xf32>
      %c0_321 = arith.constant 0 : index
      %c0_322 = arith.constant 0 : index
      %697 = vector.load %arg6[%c0_321, %c0_322] : memref<8x64xf32, #tpu.memory_space<vmem>>, vector<8x64xf32>
      tpu.vector_store %arg6[%c0_321, %c0_322], %696 {strides = array<i32>} : memref<8x64xf32, #tpu.memory_space<vmem>>, vector<8x64xf32>,
      %cst_323 = arith.constant 0.000000e+00 : f32
      %698 = vector.broadcast %cst_323 : f32 to vector<8x32xf32>
      %c0_324 = arith.constant 0 : index
      %c0_325 = arith.constant 0 : index
      %699 = vector.load %arg7[%c0_324, %c0_325] : memref<8x32xf32, #tpu.memory_space<vmem>>, vector<8x32xf32>
      tpu.vector_store %arg7[%c0_324, %c0_325], %698 {strides = array<i32>} : memref<8x32xf32, #tpu.memory_space<vmem>>, vector<8x32xf32>,
      %cst_326 = arith.constant 0.000000e+00 : f32
      %700 = vector.broadcast %cst_326 : f32 to vector<8x32xf32>
      %c0_327 = arith.constant 0 : index
      %c0_328 = arith.constant 0 : index
      %701 = vector.load %arg8[%c0_327, %c0_328] : memref<8x32xf32, #tpu.memory_space<vmem>>, vector<8x32xf32>
      tpu.vector_store %arg8[%c0_327, %c0_328], %700 {strides = array<i32>} : memref<8x32xf32, #tpu.memory_space<vmem>>, vector<8x32xf32>,
      %cst_329 = arith.constant 0xFF800000 : f32
      %702 = vector.broadcast %cst_329 : f32 to vector<8x32xf32>
      %c0_330 = arith.constant 0 : index
      %c0_331 = arith.constant 0 : index
      %703 = vector.load %arg9[%c0_330, %c0_331] : memref<8x32xf32, #tpu.memory_space<vmem>>, vector<8x32xf32>
      tpu.vector_store %arg9[%c0_330, %c0_331], %702 {strides = array<i32>} : memref<8x32xf32, #tpu.memory_space<vmem>>, vector<8x32xf32>,
      %cst_332 = arith.constant 0xFF800000 : f32
      %704 = vector.broadcast %cst_332 : f32 to vector<8x32xf32>
      %c0_333 = arith.constant 0 : index
      %c0_334 = arith.constant 0 : index
      %705 = vector.load %arg10[%c0_333, %c0_334] : memref<8x32xf32, #tpu.memory_space<vmem>>, vector<8x32xf32>
      tpu.vector_store %arg10[%c0_333, %c0_334], %704 {strides = array<i32>} : memref<8x32xf32, #tpu.memory_space<vmem>>, vector<8x32xf32>,
    } else {
    }
    %c0 = arith.constant 0 : index
    %c0_1 = arith.constant 0 : index
    %3 = vector.load %arg4[%c0, %c0_1] : memref<64x256xf32, #tpu.memory_space<vmem>>, vector<64x256xf32>
    %c0_i32_2 = arith.constant 0 : i32
    %4 = arith.index_cast %c0_i32_2 : i32 to index
    %c0_3 = arith.constant 0 : index
    %c0_4 = arith.constant 0 : index
    %5 = vector.load %arg1[%4, %c0_3, %c0_4] : memref<8x8x256xf32, #tpu.memory_space<vmem>>, vector<1x8x256xf32>
    %6 = vector.shape_cast %5 : vector<1x8x256xf32> to vector<8x256xf32>
    %c0_5 = arith.constant 0 : index
    %c0_6 = arith.constant 0 : index
    %7 = vector.load %arg6[%c0_5, %c0_6] : memref<8x64xf32, #tpu.memory_space<vmem>>, vector<8x64xf32>
    %cst = arith.constant dense<0.000000e+00> : vector<8x256xf32>
    %8 = tpu.matmul %7, %3, %cst {dimension_numbers = #tpu.dot_dimension_numbers<[1], [0], [0], [1], [0, 0, 1, 1], [], []>} : vector<8x64xf32>, vector<64x256xf32>, vector<8x256xf32> -> vector<8x256xf32>
    %9 = arith.addf %6, %8 : vector<8x256xf32>
    %10 = vector.extract_strided_slice %9 {offsets = [0, 0], sizes = [8, 32], strides = [1, 1]} : vector<8x256xf32> to vector<8x32xf32>
    %11 = arith.negf %10 : vector<8x32xf32>
    %12 = math.exp %11 : vector<8x32xf32>
    %cst_7 = arith.constant 1.000000e+00 : f32
    %13 = vector.broadcast %cst_7 : f32 to vector<8x32xf32>
    %14 = arith.addf %13, %12 : vector<8x32xf32>
    %15 = arith.divf %13, %14 : vector<8x32xf32>
    %16 = vector.extract_strided_slice %9 {offsets = [0, 32], sizes = [8, 32], strides = [1, 1]} : vector<8x256xf32> to vector<8x32xf32>
    %17 = arith.negf %16 : vector<8x32xf32>
    %18 = math.exp %17 : vector<8x32xf32>
    %cst_8 = arith.constant 1.000000e+00 : f32
    %19 = vector.broadcast %cst_8 : f32 to vector<8x32xf32>
    %20 = arith.addf %19, %18 : vector<8x32xf32>
    %21 = arith.divf %19, %20 : vector<8x32xf32>
    %22 = vector.extract_strided_slice %9 {offsets = [0, 64], sizes = [8, 32], strides = [1, 1]} : vector<8x256xf32> to vector<8x32xf32>
    %23 = math.tanh %22 : vector<8x32xf32>
    %24 = vector.extract_strided_slice %9 {offsets = [0, 96], sizes = [8, 32], strides = [1, 1]} : vector<8x256xf32> to vector<8x32xf32>
    %25 = arith.negf %24 : vector<8x32xf32>
    %26 = math.exp %25 : vector<8x32xf32>
    %cst_9 = arith.constant 1.000000e+00 : f32
    %27 = vector.broadcast %cst_9 : f32 to vector<8x32xf32>
    %28 = arith.addf %27, %26 : vector<8x32xf32>
    %29 = arith.divf %27, %28 : vector<8x32xf32>
    %30 = vector.extract_strided_slice %9 {offsets = [0, 128], sizes = [8, 32], strides = [1, 1]} : vector<8x256xf32> to vector<8x32xf32>
    %31 = arith.negf %30 : vector<8x32xf32>
    %32 = math.exp %31 : vector<8x32xf32>
    %cst_10 = arith.constant 1.000000e+00 : f32
    %33 = vector.broadcast %cst_10 : f32 to vector<8x32xf32>
    %34 = arith.addf %33, %32 : vector<8x32xf32>
    %35 = arith.divf %33, %34 : vector<8x32xf32>
    %36 = vector.extract_strided_slice %9 {offsets = [0, 160], sizes = [8, 32], strides = [1, 1]} : vector<8x256xf32> to vector<8x32xf32>
    %37 = arith.negf %36 : vector<8x32xf32>
    %38 = math.exp %37 : vector<8x32xf32>
    %cst_11 = arith.constant 1.000000e+00 : f32
    %39 = vector.broadcast %cst_11 : f32 to vector<8x32xf32>
    %40 = arith.addf %39, %38 : vector<8x32xf32>
    %41 = arith.divf %39, %40 : vector<8x32xf32>
    %42 = vector.extract_strided_slice %9 {offsets = [0, 192], sizes = [8, 32], strides = [1, 1]} : vector<8x256xf32> to vector<8x32xf32>
    %43 = math.tanh %42 : vector<8x32xf32>
    %44 = vector.extract_strided_slice %9 {offsets = [0, 224], sizes = [8, 32], strides = [1, 1]} : vector<8x256xf32> to vector<8x32xf32>
    %45 = arith.negf %44 : vector<8x32xf32>
    %46 = math.exp %45 : vector<8x32xf32>
    %cst_12 = arith.constant 1.000000e+00 : f32
    %47 = vector.broadcast %cst_12 : f32 to vector<8x32xf32>
    %48 = arith.addf %47, %46 : vector<8x32xf32>
    %49 = arith.divf %47, %48 : vector<8x32xf32>
    %c0_13 = arith.constant 0 : index
    %c0_14 = arith.constant 0 : index
    %50 = vector.load %arg7[%c0_13, %c0_14] : memref<8x32xf32, #tpu.memory_space<vmem>>, vector<8x32xf32>
    %51 = arith.mulf %21, %50 : vector<8x32xf32>
    %52 = arith.mulf %15, %23 : vector<8x32xf32>
    %53 = arith.addf %51, %52 : vector<8x32xf32>
    %c0_15 = arith.constant 0 : index
    %c0_16 = arith.constant 0 : index
    %54 = vector.load %arg8[%c0_15, %c0_16] : memref<8x32xf32, #tpu.memory_space<vmem>>, vector<8x32xf32>
    %55 = arith.mulf %41, %54 : vector<8x32xf32>
    %56 = arith.mulf %35, %43 : vector<8x32xf32>
    %57 = arith.addf %55, %56 : vector<8x32xf32>
    %58 = math.tanh %53 : vector<8x32xf32>
    %59 = arith.mulf %29, %58 : vector<8x32xf32>
    %60 = math.tanh %57 : vector<8x32xf32>
    %61 = arith.mulf %49, %60 : vector<8x32xf32>
    %c0_17 = arith.constant 0 : index
    %c0_18 = arith.constant 0 : index
    %62 = vector.load %arg7[%c0_17, %c0_18] : memref<8x32xf32, #tpu.memory_space<vmem>>, vector<8x32xf32>
    tpu.vector_store %arg7[%c0_17, %c0_18], %53 {strides = array<i32>} : memref<8x32xf32, #tpu.memory_space<vmem>>, vector<8x32xf32>,
    %c0_19 = arith.constant 0 : index
    %c0_20 = arith.constant 0 : index
    %63 = vector.load %arg8[%c0_19, %c0_20] : memref<8x32xf32, #tpu.memory_space<vmem>>, vector<8x32xf32>
    tpu.vector_store %arg8[%c0_19, %c0_20], %57 {strides = array<i32>} : memref<8x32xf32, #tpu.memory_space<vmem>>, vector<8x32xf32>,
    %64 = tpu.concatenate %59, %61 in 1 : vector<8x32xf32>, vector<8x32xf32> -> vector<8x64xf32>
    %c0_21 = arith.constant 0 : index
    %c0_22 = arith.constant 0 : index
    %65 = vector.load %arg6[%c0_21, %c0_22] : memref<8x64xf32, #tpu.memory_space<vmem>>, vector<8x64xf32>
    tpu.vector_store %arg6[%c0_21, %c0_22], %64 {strides = array<i32>} : memref<8x64xf32, #tpu.memory_space<vmem>>, vector<8x64xf32>,
    %66 = arith.index_cast %c0_i32_2 : i32 to index
    %c0_23 = arith.constant 0 : index
    %c0_24 = arith.constant 0 : index
    %67 = vector.load %arg2[%66, %c0_23, %c0_24] : memref<8x8x1xf32, #tpu.memory_space<vmem>>, vector<1x8x1xf32>
    %68 = vector.shape_cast %67 : vector<1x8x1xf32> to vector<8x1xf32>
    %69 = arith.index_cast %c0_i32_2 : i32 to index
    %c0_25 = arith.constant 0 : index
    %c0_26 = arith.constant 0 : index
    %70 = vector.load %arg3[%69, %c0_25, %c0_26] : memref<8x8x1xf32, #tpu.memory_space<vmem>>, vector<1x8x1xf32>
    %71 = vector.shape_cast %70 : vector<1x8x1xf32> to vector<8x1xf32>
    %cst_27 = arith.constant 0.000000e+00 : f32
    %72 = vector.broadcast %cst_27 : f32 to vector<8x1xf32>
    %73 = arith.cmpf ogt, %68, %72 : vector<8x1xf32>
    %c0_28 = arith.constant 0 : index
    %c0_29 = arith.constant 0 : index
    %74 = vector.load %arg9[%c0_28, %c0_29] : memref<8x32xf32, #tpu.memory_space<vmem>>, vector<8x32xf32>
    %75 = arith.maximumf %74, %59 : vector<8x32xf32>
    %c0_30 = arith.constant 0 : index
    %c0_31 = arith.constant 0 : index
    %76 = vector.load %arg9[%c0_30, %c0_31] : memref<8x32xf32, #tpu.memory_space<vmem>>, vector<8x32xf32>
    %77 = vector.shape_cast %73 : vector<8x1xi1> to vector<8x1xi1>
    %78 = vector.broadcast %77 : vector<8x1xi1> to vector<8x32xi1>
    %79 = arith.select %78, %75, %76 : vector<8x32xi1>, vector<8x32xf32>
    %c0_32 = arith.constant 0 : index
    %c0_33 = arith.constant 0 : index
    %80 = vector.load %arg9[%c0_32, %c0_33] : memref<8x32xf32, #tpu.memory_space<vmem>>, vector<8x32xf32>
    tpu.vector_store %arg9[%c0_32, %c0_33], %79 {strides = array<i32>} : memref<8x32xf32, #tpu.memory_space<vmem>>, vector<8x32xf32>,
    %cst_34 = arith.constant 0.000000e+00 : f32
    %81 = vector.broadcast %cst_34 : f32 to vector<8x1xf32>
    %82 = arith.cmpf ogt, %71, %81 : vector<8x1xf32>
    %c0_35 = arith.constant 0 : index
    %c0_36 = arith.constant 0 : index
    %83 = vector.load %arg10[%c0_35, %c0_36] : memref<8x32xf32, #tpu.memory_space<vmem>>, vector<8x32xf32>
    %84 = arith.maximumf %83, %61 : vector<8x32xf32>
    %c0_37 = arith.constant 0 : index
    %c0_38 = arith.constant 0 : index
    %85 = vector.load %arg10[%c0_37, %c0_38] : memref<8x32xf32, #tpu.memory_space<vmem>>, vector<8x32xf32>
    %86 = vector.shape_cast %82 : vector<8x1xi1> to vector<8x1xi1>
    %87 = vector.broadcast %86 : vector<8x1xi1> to vector<8x32xi1>
    %88 = arith.select %87, %84, %85 : vector<8x32xi1>, vector<8x32xf32>
    %c0_39 = arith.constant 0 : index
    %c0_40 = arith.constant 0 : index
    %89 = vector.load %arg10[%c0_39, %c0_40] : memref<8x32xf32, #tpu.memory_space<vmem>>, vector<8x32xf32>
    tpu.vector_store %arg10[%c0_39, %c0_40], %88 {strides = array<i32>} : memref<8x32xf32, #tpu.memory_space<vmem>>, vector<8x32xf32>,
    %c1_i32 = arith.constant 1 : i32
    %90 = arith.index_cast %c1_i32 : i32 to index
    %c0_41 = arith.constant 0 : index
    %c0_42 = arith.constant 0 : index
    %91 = vector.load %arg1[%90, %c0_41, %c0_42] : memref<8x8x256xf32, #tpu.memory_space<vmem>>, vector<1x8x256xf32>
    %92 = vector.shape_cast %91 : vector<1x8x256xf32> to vector<8x256xf32>
    %c0_43 = arith.constant 0 : index
    %c0_44 = arith.constant 0 : index
    %93 = vector.load %arg6[%c0_43, %c0_44] : memref<8x64xf32, #tpu.memory_space<vmem>>, vector<8x64xf32>
    %cst_45 = arith.constant dense<0.000000e+00> : vector<8x256xf32>
    %94 = tpu.matmul %93, %3, %cst_45 {dimension_numbers = #tpu.dot_dimension_numbers<[1], [0], [0], [1], [0, 0, 1, 1], [], []>} : vector<8x64xf32>, vector<64x256xf32>, vector<8x256xf32> -> vector<8x256xf32>
    %95 = arith.addf %92, %94 : vector<8x256xf32>
    %96 = vector.extract_strided_slice %95 {offsets = [0, 0], sizes = [8, 32], strides = [1, 1]} : vector<8x256xf32> to vector<8x32xf32>
    %97 = arith.negf %96 : vector<8x32xf32>
    %98 = math.exp %97 : vector<8x32xf32>
    %cst_46 = arith.constant 1.000000e+00 : f32
    %99 = vector.broadcast %cst_46 : f32 to vector<8x32xf32>
    %100 = arith.addf %99, %98 : vector<8x32xf32>
    %101 = arith.divf %99, %100 : vector<8x32xf32>
    %102 = vector.extract_strided_slice %95 {offsets = [0, 32], sizes = [8, 32], strides = [1, 1]} : vector<8x256xf32> to vector<8x32xf32>
    %103 = arith.negf %102 : vector<8x32xf32>
    %104 = math.exp %103 : vector<8x32xf32>
    %cst_47 = arith.constant 1.000000e+00 : f32
    %105 = vector.broadcast %cst_47 : f32 to vector<8x32xf32>
    %106 = arith.addf %105, %104 : vector<8x32xf32>
    %107 = arith.divf %105, %106 : vector<8x32xf32>
    %108 = vector.extract_strided_slice %95 {offsets = [0, 64], sizes = [8, 32], strides = [1, 1]} : vector<8x256xf32> to vector<8x32xf32>
    %109 = math.tanh %108 : vector<8x32xf32>
    %110 = vector.extract_strided_slice %95 {offsets = [0, 96], sizes = [8, 32], strides = [1, 1]} : vector<8x256xf32> to vector<8x32xf32>
    %111 = arith.negf %110 : vector<8x32xf32>
    %112 = math.exp %111 : vector<8x32xf32>
    %cst_48 = arith.constant 1.000000e+00 : f32
    %113 = vector.broadcast %cst_48 : f32 to vector<8x32xf32>
    %114 = arith.addf %113, %112 : vector<8x32xf32>
    %115 = arith.divf %113, %114 : vector<8x32xf32>
    %116 = vector.extract_strided_slice %95 {offsets = [0, 128], sizes = [8, 32], strides = [1, 1]} : vector<8x256xf32> to vector<8x32xf32>
    %117 = arith.negf %116 : vector<8x32xf32>
    %118 = math.exp %117 : vector<8x32xf32>
    %cst_49 = arith.constant 1.000000e+00 : f32
    %119 = vector.broadcast %cst_49 : f32 to vector<8x32xf32>
    %120 = arith.addf %119, %118 : vector<8x32xf32>
    %121 = arith.divf %119, %120 : vector<8x32xf32>
    %122 = vector.extract_strided_slice %95 {offsets = [0, 160], sizes = [8, 32], strides = [1, 1]} : vector<8x256xf32> to vector<8x32xf32>
    %123 = arith.negf %122 : vector<8x32xf32>
    %124 = math.exp %123 : vector<8x32xf32>
    %cst_50 = arith.constant 1.000000e+00 : f32
    %125 = vector.broadcast %cst_50 : f32 to vector<8x32xf32>
    %126 = arith.addf %125, %124 : vector<8x32xf32>
    %127 = arith.divf %125, %126 : vector<8x32xf32>
    %128 = vector.extract_strided_slice %95 {offsets = [0, 192], sizes = [8, 32], strides = [1, 1]} : vector<8x256xf32> to vector<8x32xf32>
    %129 = math.tanh %128 : vector<8x32xf32>
    %130 = vector.extract_strided_slice %95 {offsets = [0, 224], sizes = [8, 32], strides = [1, 1]} : vector<8x256xf32> to vector<8x32xf32>
    %131 = arith.negf %130 : vector<8x32xf32>
    %132 = math.exp %131 : vector<8x32xf32>
    %cst_51 = arith.constant 1.000000e+00 : f32
    %133 = vector.broadcast %cst_51 : f32 to vector<8x32xf32>
    %134 = arith.addf %133, %132 : vector<8x32xf32>
    %135 = arith.divf %133, %134 : vector<8x32xf32>
    %c0_52 = arith.constant 0 : index
    %c0_53 = arith.constant 0 : index
    %136 = vector.load %arg7[%c0_52, %c0_53] : memref<8x32xf32, #tpu.memory_space<vmem>>, vector<8x32xf32>
    %137 = arith.mulf %107, %136 : vector<8x32xf32>
    %138 = arith.mulf %101, %109 : vector<8x32xf32>
    %139 = arith.addf %137, %138 : vector<8x32xf32>
    %c0_54 = arith.constant 0 : index
    %c0_55 = arith.constant 0 : index
    %140 = vector.load %arg8[%c0_54, %c0_55] : memref<8x32xf32, #tpu.memory_space<vmem>>, vector<8x32xf32>
    %141 = arith.mulf %127, %140 : vector<8x32xf32>
    %142 = arith.mulf %121, %129 : vector<8x32xf32>
    %143 = arith.addf %141, %142 : vector<8x32xf32>
    %144 = math.tanh %139 : vector<8x32xf32>
    %145 = arith.mulf %115, %144 : vector<8x32xf32>
    %146 = math.tanh %143 : vector<8x32xf32>
    %147 = arith.mulf %135, %146 : vector<8x32xf32>
    %c0_56 = arith.constant 0 : index
    %c0_57 = arith.constant 0 : index
    %148 = vector.load %arg7[%c0_56, %c0_57] : memref<8x32xf32, #tpu.memory_space<vmem>>, vector<8x32xf32>
    tpu.vector_store %arg7[%c0_56, %c0_57], %139 {strides = array<i32>} : memref<8x32xf32, #tpu.memory_space<vmem>>, vector<8x32xf32>,
    %c0_58 = arith.constant 0 : index
    %c0_59 = arith.constant 0 : index
    %149 = vector.load %arg8[%c0_58, %c0_59] : memref<8x32xf32, #tpu.memory_space<vmem>>, vector<8x32xf32>
    tpu.vector_store %arg8[%c0_58, %c0_59], %143 {strides = array<i32>} : memref<8x32xf32, #tpu.memory_space<vmem>>, vector<8x32xf32>,
    %150 = tpu.concatenate %145, %147 in 1 : vector<8x32xf32>, vector<8x32xf32> -> vector<8x64xf32>
    %c0_60 = arith.constant 0 : index
    %c0_61 = arith.constant 0 : index
    %151 = vector.load %arg6[%c0_60, %c0_61] : memref<8x64xf32, #tpu.memory_space<vmem>>, vector<8x64xf32>
    tpu.vector_store %arg6[%c0_60, %c0_61], %150 {strides = array<i32>} : memref<8x64xf32, #tpu.memory_space<vmem>>, vector<8x64xf32>,
    %152 = arith.index_cast %c1_i32 : i32 to index
    %c0_62 = arith.constant 0 : index
    %c0_63 = arith.constant 0 : index
    %153 = vector.load %arg2[%152, %c0_62, %c0_63] : memref<8x8x1xf32, #tpu.memory_space<vmem>>, vector<1x8x1xf32>
    %154 = vector.shape_cast %153 : vector<1x8x1xf32> to vector<8x1xf32>
    %155 = arith.index_cast %c1_i32 : i32 to index
    %c0_64 = arith.constant 0 : index
    %c0_65 = arith.constant 0 : index
    %156 = vector.load %arg3[%155, %c0_64, %c0_65] : memref<8x8x1xf32, #tpu.memory_space<vmem>>, vector<1x8x1xf32>
    %157 = vector.shape_cast %156 : vector<1x8x1xf32> to vector<8x1xf32>
    %cst_66 = arith.constant 0.000000e+00 : f32
    %158 = vector.broadcast %cst_66 : f32 to vector<8x1xf32>
    %159 = arith.cmpf ogt, %154, %158 : vector<8x1xf32>
    %c0_67 = arith.constant 0 : index
    %c0_68 = arith.constant 0 : index
    %160 = vector.load %arg9[%c0_67, %c0_68] : memref<8x32xf32, #tpu.memory_space<vmem>>, vector<8x32xf32>
    %161 = arith.maximumf %160, %145 : vector<8x32xf32>
    %c0_69 = arith.constant 0 : index
    %c0_70 = arith.constant 0 : index
    %162 = vector.load %arg9[%c0_69, %c0_70] : memref<8x32xf32, #tpu.memory_space<vmem>>, vector<8x32xf32>
    %163 = vector.shape_cast %159 : vector<8x1xi1> to vector<8x1xi1>
    %164 = vector.broadcast %163 : vector<8x1xi1> to vector<8x32xi1>
    %165 = arith.select %164, %161, %162 : vector<8x32xi1>, vector<8x32xf32>
    %c0_71 = arith.constant 0 : index
    %c0_72 = arith.constant 0 : index
    %166 = vector.load %arg9[%c0_71, %c0_72] : memref<8x32xf32, #tpu.memory_space<vmem>>, vector<8x32xf32>
    tpu.vector_store %arg9[%c0_71, %c0_72], %165 {strides = array<i32>} : memref<8x32xf32, #tpu.memory_space<vmem>>, vector<8x32xf32>,
    %cst_73 = arith.constant 0.000000e+00 : f32
    %167 = vector.broadcast %cst_73 : f32 to vector<8x1xf32>
    %168 = arith.cmpf ogt, %157, %167 : vector<8x1xf32>
    %c0_74 = arith.constant 0 : index
    %c0_75 = arith.constant 0 : index
    %169 = vector.load %arg10[%c0_74, %c0_75] : memref<8x32xf32, #tpu.memory_space<vmem>>, vector<8x32xf32>
    %170 = arith.maximumf %169, %147 : vector<8x32xf32>
    %c0_76 = arith.constant 0 : index
    %c0_77 = arith.constant 0 : index
    %171 = vector.load %arg10[%c0_76, %c0_77] : memref<8x32xf32, #tpu.memory_space<vmem>>, vector<8x32xf32>
    %172 = vector.shape_cast %168 : vector<8x1xi1> to vector<8x1xi1>
    %173 = vector.broadcast %172 : vector<8x1xi1> to vector<8x32xi1>
    %174 = arith.select %173, %170, %171 : vector<8x32xi1>, vector<8x32xf32>
    %c0_78 = arith.constant 0 : index
    %c0_79 = arith.constant 0 : index
    %175 = vector.load %arg10[%c0_78, %c0_79] : memref<8x32xf32, #tpu.memory_space<vmem>>, vector<8x32xf32>
    tpu.vector_store %arg10[%c0_78, %c0_79], %174 {strides = array<i32>} : memref<8x32xf32, #tpu.memory_space<vmem>>, vector<8x32xf32>,
    %c2_i32 = arith.constant 2 : i32
    %176 = arith.index_cast %c2_i32 : i32 to index
    %c0_80 = arith.constant 0 : index
    %c0_81 = arith.constant 0 : index
    %177 = vector.load %arg1[%176, %c0_80, %c0_81] : memref<8x8x256xf32, #tpu.memory_space<vmem>>, vector<1x8x256xf32>
    %178 = vector.shape_cast %177 : vector<1x8x256xf32> to vector<8x256xf32>
    %c0_82 = arith.constant 0 : index
    %c0_83 = arith.constant 0 : index
    %179 = vector.load %arg6[%c0_82, %c0_83] : memref<8x64xf32, #tpu.memory_space<vmem>>, vector<8x64xf32>
    %cst_84 = arith.constant dense<0.000000e+00> : vector<8x256xf32>
    %180 = tpu.matmul %179, %3, %cst_84 {dimension_numbers = #tpu.dot_dimension_numbers<[1], [0], [0], [1], [0, 0, 1, 1], [], []>} : vector<8x64xf32>, vector<64x256xf32>, vector<8x256xf32> -> vector<8x256xf32>
    %181 = arith.addf %178, %180 : vector<8x256xf32>
    %182 = vector.extract_strided_slice %181 {offsets = [0, 0], sizes = [8, 32], strides = [1, 1]} : vector<8x256xf32> to vector<8x32xf32>
    %183 = arith.negf %182 : vector<8x32xf32>
    %184 = math.exp %183 : vector<8x32xf32>
    %cst_85 = arith.constant 1.000000e+00 : f32
    %185 = vector.broadcast %cst_85 : f32 to vector<8x32xf32>
    %186 = arith.addf %185, %184 : vector<8x32xf32>
    %187 = arith.divf %185, %186 : vector<8x32xf32>
    %188 = vector.extract_strided_slice %181 {offsets = [0, 32], sizes = [8, 32], strides = [1, 1]} : vector<8x256xf32> to vector<8x32xf32>
    %189 = arith.negf %188 : vector<8x32xf32>
    %190 = math.exp %189 : vector<8x32xf32>
    %cst_86 = arith.constant 1.000000e+00 : f32
    %191 = vector.broadcast %cst_86 : f32 to vector<8x32xf32>
    %192 = arith.addf %191, %190 : vector<8x32xf32>
    %193 = arith.divf %191, %192 : vector<8x32xf32>
    %194 = vector.extract_strided_slice %181 {offsets = [0, 64], sizes = [8, 32], strides = [1, 1]} : vector<8x256xf32> to vector<8x32xf32>
    %195 = math.tanh %194 : vector<8x32xf32>
    %196 = vector.extract_strided_slice %181 {offsets = [0, 96], sizes = [8, 32], strides = [1, 1]} : vector<8x256xf32> to vector<8x32xf32>
    %197 = arith.negf %196 : vector<8x32xf32>
    %198 = math.exp %197 : vector<8x32xf32>
    %cst_87 = arith.constant 1.000000e+00 : f32
    %199 = vector.broadcast %cst_87 : f32 to vector<8x32xf32>
    %200 = arith.addf %199, %198 : vector<8x32xf32>
    %201 = arith.divf %199, %200 : vector<8x32xf32>
    %202 = vector.extract_strided_slice %181 {offsets = [0, 128], sizes = [8, 32], strides = [1, 1]} : vector<8x256xf32> to vector<8x32xf32>
    %203 = arith.negf %202 : vector<8x32xf32>
    %204 = math.exp %203 : vector<8x32xf32>
    %cst_88 = arith.constant 1.000000e+00 : f32
    %205 = vector.broadcast %cst_88 : f32 to vector<8x32xf32>
    %206 = arith.addf %205, %204 : vector<8x32xf32>
    %207 = arith.divf %205, %206 : vector<8x32xf32>
    %208 = vector.extract_strided_slice %181 {offsets = [0, 160], sizes = [8, 32], strides = [1, 1]} : vector<8x256xf32> to vector<8x32xf32>
    %209 = arith.negf %208 : vector<8x32xf32>
    %210 = math.exp %209 : vector<8x32xf32>
    %cst_89 = arith.constant 1.000000e+00 : f32
    %211 = vector.broadcast %cst_89 : f32 to vector<8x32xf32>
    %212 = arith.addf %211, %210 : vector<8x32xf32>
    %213 = arith.divf %211, %212 : vector<8x32xf32>
    %214 = vector.extract_strided_slice %181 {offsets = [0, 192], sizes = [8, 32], strides = [1, 1]} : vector<8x256xf32> to vector<8x32xf32>
    %215 = math.tanh %214 : vector<8x32xf32>
    %216 = vector.extract_strided_slice %181 {offsets = [0, 224], sizes = [8, 32], strides = [1, 1]} : vector<8x256xf32> to vector<8x32xf32>
    %217 = arith.negf %216 : vector<8x32xf32>
    %218 = math.exp %217 : vector<8x32xf32>
    %cst_90 = arith.constant 1.000000e+00 : f32
    %219 = vector.broadcast %cst_90 : f32 to vector<8x32xf32>
    %220 = arith.addf %219, %218 : vector<8x32xf32>
    %221 = arith.divf %219, %220 : vector<8x32xf32>
    %c0_91 = arith.constant 0 : index
    %c0_92 = arith.constant 0 : index
    %222 = vector.load %arg7[%c0_91, %c0_92] : memref<8x32xf32, #tpu.memory_space<vmem>>, vector<8x32xf32>
    %223 = arith.mulf %193, %222 : vector<8x32xf32>
    %224 = arith.mulf %187, %195 : vector<8x32xf32>
    %225 = arith.addf %223, %224 : vector<8x32xf32>
    %c0_93 = arith.constant 0 : index
    %c0_94 = arith.constant 0 : index
    %226 = vector.load %arg8[%c0_93, %c0_94] : memref<8x32xf32, #tpu.memory_space<vmem>>, vector<8x32xf32>
    %227 = arith.mulf %213, %226 : vector<8x32xf32>
    %228 = arith.mulf %207, %215 : vector<8x32xf32>
    %229 = arith.addf %227, %228 : vector<8x32xf32>
    %230 = math.tanh %225 : vector<8x32xf32>
    %231 = arith.mulf %201, %230 : vector<8x32xf32>
    %232 = math.tanh %229 : vector<8x32xf32>
    %233 = arith.mulf %221, %232 : vector<8x32xf32>
    %c0_95 = arith.constant 0 : index
    %c0_96 = arith.constant 0 : index
    %234 = vector.load %arg7[%c0_95, %c0_96] : memref<8x32xf32, #tpu.memory_space<vmem>>, vector<8x32xf32>
    tpu.vector_store %arg7[%c0_95, %c0_96], %225 {strides = array<i32>} : memref<8x32xf32, #tpu.memory_space<vmem>>, vector<8x32xf32>,
    %c0_97 = arith.constant 0 : index
    %c0_98 = arith.constant 0 : index
    %235 = vector.load %arg8[%c0_97, %c0_98] : memref<8x32xf32, #tpu.memory_space<vmem>>, vector<8x32xf32>
    tpu.vector_store %arg8[%c0_97, %c0_98], %229 {strides = array<i32>} : memref<8x32xf32, #tpu.memory_space<vmem>>, vector<8x32xf32>,
    %236 = tpu.concatenate %231, %233 in 1 : vector<8x32xf32>, vector<8x32xf32> -> vector<8x64xf32>
    %c0_99 = arith.constant 0 : index
    %c0_100 = arith.constant 0 : index
    %237 = vector.load %arg6[%c0_99, %c0_100] : memref<8x64xf32, #tpu.memory_space<vmem>>, vector<8x64xf32>
    tpu.vector_store %arg6[%c0_99, %c0_100], %236 {strides = array<i32>} : memref<8x64xf32, #tpu.memory_space<vmem>>, vector<8x64xf32>,
    %238 = arith.index_cast %c2_i32 : i32 to index
    %c0_101 = arith.constant 0 : index
    %c0_102 = arith.constant 0 : index
    %239 = vector.load %arg2[%238, %c0_101, %c0_102] : memref<8x8x1xf32, #tpu.memory_space<vmem>>, vector<1x8x1xf32>
    %240 = vector.shape_cast %239 : vector<1x8x1xf32> to vector<8x1xf32>
    %241 = arith.index_cast %c2_i32 : i32 to index
    %c0_103 = arith.constant 0 : index
    %c0_104 = arith.constant 0 : index
    %242 = vector.load %arg3[%241, %c0_103, %c0_104] : memref<8x8x1xf32, #tpu.memory_space<vmem>>, vector<1x8x1xf32>
    %243 = vector.shape_cast %242 : vector<1x8x1xf32> to vector<8x1xf32>
    %cst_105 = arith.constant 0.000000e+00 : f32
    %244 = vector.broadcast %cst_105 : f32 to vector<8x1xf32>
    %245 = arith.cmpf ogt, %240, %244 : vector<8x1xf32>
    %c0_106 = arith.constant 0 : index
    %c0_107 = arith.constant 0 : index
    %246 = vector.load %arg9[%c0_106, %c0_107] : memref<8x32xf32, #tpu.memory_space<vmem>>, vector<8x32xf32>
    %247 = arith.maximumf %246, %231 : vector<8x32xf32>
    %c0_108 = arith.constant 0 : index
    %c0_109 = arith.constant 0 : index
    %248 = vector.load %arg9[%c0_108, %c0_109] : memref<8x32xf32, #tpu.memory_space<vmem>>, vector<8x32xf32>
    %249 = vector.shape_cast %245 : vector<8x1xi1> to vector<8x1xi1>
    %250 = vector.broadcast %249 : vector<8x1xi1> to vector<8x32xi1>
    %251 = arith.select %250, %247, %248 : vector<8x32xi1>, vector<8x32xf32>
    %c0_110 = arith.constant 0 : index
    %c0_111 = arith.constant 0 : index
    %252 = vector.load %arg9[%c0_110, %c0_111] : memref<8x32xf32, #tpu.memory_space<vmem>>, vector<8x32xf32>
    tpu.vector_store %arg9[%c0_110, %c0_111], %251 {strides = array<i32>} : memref<8x32xf32, #tpu.memory_space<vmem>>, vector<8x32xf32>,
    %cst_112 = arith.constant 0.000000e+00 : f32
    %253 = vector.broadcast %cst_112 : f32 to vector<8x1xf32>
    %254 = arith.cmpf ogt, %243, %253 : vector<8x1xf32>
    %c0_113 = arith.constant 0 : index
    %c0_114 = arith.constant 0 : index
    %255 = vector.load %arg10[%c0_113, %c0_114] : memref<8x32xf32, #tpu.memory_space<vmem>>, vector<8x32xf32>
    %256 = arith.maximumf %255, %233 : vector<8x32xf32>
    %c0_115 = arith.constant 0 : index
    %c0_116 = arith.constant 0 : index
    %257 = vector.load %arg10[%c0_115, %c0_116] : memref<8x32xf32, #tpu.memory_space<vmem>>, vector<8x32xf32>
    %258 = vector.shape_cast %254 : vector<8x1xi1> to vector<8x1xi1>
    %259 = vector.broadcast %258 : vector<8x1xi1> to vector<8x32xi1>
    %260 = arith.select %259, %256, %257 : vector<8x32xi1>, vector<8x32xf32>
    %c0_117 = arith.constant 0 : index
    %c0_118 = arith.constant 0 : index
    %261 = vector.load %arg10[%c0_117, %c0_118] : memref<8x32xf32, #tpu.memory_space<vmem>>, vector<8x32xf32>
    tpu.vector_store %arg10[%c0_117, %c0_118], %260 {strides = array<i32>} : memref<8x32xf32, #tpu.memory_space<vmem>>, vector<8x32xf32>,
    %c3_i32 = arith.constant 3 : i32
    %262 = arith.index_cast %c3_i32 : i32 to index
    %c0_119 = arith.constant 0 : index
    %c0_120 = arith.constant 0 : index
    %263 = vector.load %arg1[%262, %c0_119, %c0_120] : memref<8x8x256xf32, #tpu.memory_space<vmem>>, vector<1x8x256xf32>
    %264 = vector.shape_cast %263 : vector<1x8x256xf32> to vector<8x256xf32>
    %c0_121 = arith.constant 0 : index
    %c0_122 = arith.constant 0 : index
    %265 = vector.load %arg6[%c0_121, %c0_122] : memref<8x64xf32, #tpu.memory_space<vmem>>, vector<8x64xf32>
    %cst_123 = arith.constant dense<0.000000e+00> : vector<8x256xf32>
    %266 = tpu.matmul %265, %3, %cst_123 {dimension_numbers = #tpu.dot_dimension_numbers<[1], [0], [0], [1], [0, 0, 1, 1], [], []>} : vector<8x64xf32>, vector<64x256xf32>, vector<8x256xf32> -> vector<8x256xf32>
    %267 = arith.addf %264, %266 : vector<8x256xf32>
    %268 = vector.extract_strided_slice %267 {offsets = [0, 0], sizes = [8, 32], strides = [1, 1]} : vector<8x256xf32> to vector<8x32xf32>
    %269 = arith.negf %268 : vector<8x32xf32>
    %270 = math.exp %269 : vector<8x32xf32>
    %cst_124 = arith.constant 1.000000e+00 : f32
    %271 = vector.broadcast %cst_124 : f32 to vector<8x32xf32>
    %272 = arith.addf %271, %270 : vector<8x32xf32>
    %273 = arith.divf %271, %272 : vector<8x32xf32>
    %274 = vector.extract_strided_slice %267 {offsets = [0, 32], sizes = [8, 32], strides = [1, 1]} : vector<8x256xf32> to vector<8x32xf32>
    %275 = arith.negf %274 : vector<8x32xf32>
    %276 = math.exp %275 : vector<8x32xf32>
    %cst_125 = arith.constant 1.000000e+00 : f32
    %277 = vector.broadcast %cst_125 : f32 to vector<8x32xf32>
    %278 = arith.addf %277, %276 : vector<8x32xf32>
    %279 = arith.divf %277, %278 : vector<8x32xf32>
    %280 = vector.extract_strided_slice %267 {offsets = [0, 64], sizes = [8, 32], strides = [1, 1]} : vector<8x256xf32> to vector<8x32xf32>
    %281 = math.tanh %280 : vector<8x32xf32>
    %282 = vector.extract_strided_slice %267 {offsets = [0, 96], sizes = [8, 32], strides = [1, 1]} : vector<8x256xf32> to vector<8x32xf32>
    %283 = arith.negf %282 : vector<8x32xf32>
    %284 = math.exp %283 : vector<8x32xf32>
    %cst_126 = arith.constant 1.000000e+00 : f32
    %285 = vector.broadcast %cst_126 : f32 to vector<8x32xf32>
    %286 = arith.addf %285, %284 : vector<8x32xf32>
    %287 = arith.divf %285, %286 : vector<8x32xf32>
    %288 = vector.extract_strided_slice %267 {offsets = [0, 128], sizes = [8, 32], strides = [1, 1]} : vector<8x256xf32> to vector<8x32xf32>
    %289 = arith.negf %288 : vector<8x32xf32>
    %290 = math.exp %289 : vector<8x32xf32>
    %cst_127 = arith.constant 1.000000e+00 : f32
    %291 = vector.broadcast %cst_127 : f32 to vector<8x32xf32>
    %292 = arith.addf %291, %290 : vector<8x32xf32>
    %293 = arith.divf %291, %292 : vector<8x32xf32>
    %294 = vector.extract_strided_slice %267 {offsets = [0, 160], sizes = [8, 32], strides = [1, 1]} : vector<8x256xf32> to vector<8x32xf32>
    %295 = arith.negf %294 : vector<8x32xf32>
    %296 = math.exp %295 : vector<8x32xf32>
    %cst_128 = arith.constant 1.000000e+00 : f32
    %297 = vector.broadcast %cst_128 : f32 to vector<8x32xf32>
    %298 = arith.addf %297, %296 : vector<8x32xf32>
    %299 = arith.divf %297, %298 : vector<8x32xf32>
    %300 = vector.extract_strided_slice %267 {offsets = [0, 192], sizes = [8, 32], strides = [1, 1]} : vector<8x256xf32> to vector<8x32xf32>
    %301 = math.tanh %300 : vector<8x32xf32>
    %302 = vector.extract_strided_slice %267 {offsets = [0, 224], sizes = [8, 32], strides = [1, 1]} : vector<8x256xf32> to vector<8x32xf32>
    %303 = arith.negf %302 : vector<8x32xf32>
    %304 = math.exp %303 : vector<8x32xf32>
    %cst_129 = arith.constant 1.000000e+00 : f32
    %305 = vector.broadcast %cst_129 : f32 to vector<8x32xf32>
    %306 = arith.addf %305, %304 : vector<8x32xf32>
    %307 = arith.divf %305, %306 : vector<8x32xf32>
    %c0_130 = arith.constant 0 : index
    %c0_131 = arith.constant 0 : index
    %308 = vector.load %arg7[%c0_130, %c0_131] : memref<8x32xf32, #tpu.memory_space<vmem>>, vector<8x32xf32>
    %309 = arith.mulf %279, %308 : vector<8x32xf32>
    %310 = arith.mulf %273, %281 : vector<8x32xf32>
    %311 = arith.addf %309, %310 : vector<8x32xf32>
    %c0_132 = arith.constant 0 : index
    %c0_133 = arith.constant 0 : index
    %312 = vector.load %arg8[%c0_132, %c0_133] : memref<8x32xf32, #tpu.memory_space<vmem>>, vector<8x32xf32>
    %313 = arith.mulf %299, %312 : vector<8x32xf32>
    %314 = arith.mulf %293, %301 : vector<8x32xf32>
    %315 = arith.addf %313, %314 : vector<8x32xf32>
    %316 = math.tanh %311 : vector<8x32xf32>
    %317 = arith.mulf %287, %316 : vector<8x32xf32>
    %318 = math.tanh %315 : vector<8x32xf32>
    %319 = arith.mulf %307, %318 : vector<8x32xf32>
    %c0_134 = arith.constant 0 : index
    %c0_135 = arith.constant 0 : index
    %320 = vector.load %arg7[%c0_134, %c0_135] : memref<8x32xf32, #tpu.memory_space<vmem>>, vector<8x32xf32>
    tpu.vector_store %arg7[%c0_134, %c0_135], %311 {strides = array<i32>} : memref<8x32xf32, #tpu.memory_space<vmem>>, vector<8x32xf32>,
    %c0_136 = arith.constant 0 : index
    %c0_137 = arith.constant 0 : index
    %321 = vector.load %arg8[%c0_136, %c0_137] : memref<8x32xf32, #tpu.memory_space<vmem>>, vector<8x32xf32>
    tpu.vector_store %arg8[%c0_136, %c0_137], %315 {strides = array<i32>} : memref<8x32xf32, #tpu.memory_space<vmem>>, vector<8x32xf32>,
    %322 = tpu.concatenate %317, %319 in 1 : vector<8x32xf32>, vector<8x32xf32> -> vector<8x64xf32>
    %c0_138 = arith.constant 0 : index
    %c0_139 = arith.constant 0 : index
    %323 = vector.load %arg6[%c0_138, %c0_139] : memref<8x64xf32, #tpu.memory_space<vmem>>, vector<8x64xf32>
    tpu.vector_store %arg6[%c0_138, %c0_139], %322 {strides = array<i32>} : memref<8x64xf32, #tpu.memory_space<vmem>>, vector<8x64xf32>,
    %324 = arith.index_cast %c3_i32 : i32 to index
    %c0_140 = arith.constant 0 : index
    %c0_141 = arith.constant 0 : index
    %325 = vector.load %arg2[%324, %c0_140, %c0_141] : memref<8x8x1xf32, #tpu.memory_space<vmem>>, vector<1x8x1xf32>
    %326 = vector.shape_cast %325 : vector<1x8x1xf32> to vector<8x1xf32>
    %327 = arith.index_cast %c3_i32 : i32 to index
    %c0_142 = arith.constant 0 : index
    %c0_143 = arith.constant 0 : index
    %328 = vector.load %arg3[%327, %c0_142, %c0_143] : memref<8x8x1xf32, #tpu.memory_space<vmem>>, vector<1x8x1xf32>
    %329 = vector.shape_cast %328 : vector<1x8x1xf32> to vector<8x1xf32>
    %cst_144 = arith.constant 0.000000e+00 : f32
    %330 = vector.broadcast %cst_144 : f32 to vector<8x1xf32>
    %331 = arith.cmpf ogt, %326, %330 : vector<8x1xf32>
    %c0_145 = arith.constant 0 : index
    %c0_146 = arith.constant 0 : index
    %332 = vector.load %arg9[%c0_145, %c0_146] : memref<8x32xf32, #tpu.memory_space<vmem>>, vector<8x32xf32>
    %333 = arith.maximumf %332, %317 : vector<8x32xf32>
    %c0_147 = arith.constant 0 : index
    %c0_148 = arith.constant 0 : index
    %334 = vector.load %arg9[%c0_147, %c0_148] : memref<8x32xf32, #tpu.memory_space<vmem>>, vector<8x32xf32>
    %335 = vector.shape_cast %331 : vector<8x1xi1> to vector<8x1xi1>
    %336 = vector.broadcast %335 : vector<8x1xi1> to vector<8x32xi1>
    %337 = arith.select %336, %333, %334 : vector<8x32xi1>, vector<8x32xf32>
    %c0_149 = arith.constant 0 : index
    %c0_150 = arith.constant 0 : index
    %338 = vector.load %arg9[%c0_149, %c0_150] : memref<8x32xf32, #tpu.memory_space<vmem>>, vector<8x32xf32>
    tpu.vector_store %arg9[%c0_149, %c0_150], %337 {strides = array<i32>} : memref<8x32xf32, #tpu.memory_space<vmem>>, vector<8x32xf32>,
    %cst_151 = arith.constant 0.000000e+00 : f32
    %339 = vector.broadcast %cst_151 : f32 to vector<8x1xf32>
    %340 = arith.cmpf ogt, %329, %339 : vector<8x1xf32>
    %c0_152 = arith.constant 0 : index
    %c0_153 = arith.constant 0 : index
    %341 = vector.load %arg10[%c0_152, %c0_153] : memref<8x32xf32, #tpu.memory_space<vmem>>, vector<8x32xf32>
    %342 = arith.maximumf %341, %319 : vector<8x32xf32>
    %c0_154 = arith.constant 0 : index
    %c0_155 = arith.constant 0 : index
    %343 = vector.load %arg10[%c0_154, %c0_155] : memref<8x32xf32, #tpu.memory_space<vmem>>, vector<8x32xf32>
    %344 = vector.shape_cast %340 : vector<8x1xi1> to vector<8x1xi1>
    %345 = vector.broadcast %344 : vector<8x1xi1> to vector<8x32xi1>
    %346 = arith.select %345, %342, %343 : vector<8x32xi1>, vector<8x32xf32>
    %c0_156 = arith.constant 0 : index
    %c0_157 = arith.constant 0 : index
    %347 = vector.load %arg10[%c0_156, %c0_157] : memref<8x32xf32, #tpu.memory_space<vmem>>, vector<8x32xf32>
    tpu.vector_store %arg10[%c0_156, %c0_157], %346 {strides = array<i32>} : memref<8x32xf32, #tpu.memory_space<vmem>>, vector<8x32xf32>,
    %c4_i32 = arith.constant 4 : i32
    %348 = arith.index_cast %c4_i32 : i32 to index
    %c0_158 = arith.constant 0 : index
    %c0_159 = arith.constant 0 : index
    %349 = vector.load %arg1[%348, %c0_158, %c0_159] : memref<8x8x256xf32, #tpu.memory_space<vmem>>, vector<1x8x256xf32>
    %350 = vector.shape_cast %349 : vector<1x8x256xf32> to vector<8x256xf32>
    %c0_160 = arith.constant 0 : index
    %c0_161 = arith.constant 0 : index
    %351 = vector.load %arg6[%c0_160, %c0_161] : memref<8x64xf32, #tpu.memory_space<vmem>>, vector<8x64xf32>
    %cst_162 = arith.constant dense<0.000000e+00> : vector<8x256xf32>
    %352 = tpu.matmul %351, %3, %cst_162 {dimension_numbers = #tpu.dot_dimension_numbers<[1], [0], [0], [1], [0, 0, 1, 1], [], []>} : vector<8x64xf32>, vector<64x256xf32>, vector<8x256xf32> -> vector<8x256xf32>
    %353 = arith.addf %350, %352 : vector<8x256xf32>
    %354 = vector.extract_strided_slice %353 {offsets = [0, 0], sizes = [8, 32], strides = [1, 1]} : vector<8x256xf32> to vector<8x32xf32>
    %355 = arith.negf %354 : vector<8x32xf32>
    %356 = math.exp %355 : vector<8x32xf32>
    %cst_163 = arith.constant 1.000000e+00 : f32
    %357 = vector.broadcast %cst_163 : f32 to vector<8x32xf32>
    %358 = arith.addf %357, %356 : vector<8x32xf32>
    %359 = arith.divf %357, %358 : vector<8x32xf32>
    %360 = vector.extract_strided_slice %353 {offsets = [0, 32], sizes = [8, 32], strides = [1, 1]} : vector<8x256xf32> to vector<8x32xf32>
    %361 = arith.negf %360 : vector<8x32xf32>
    %362 = math.exp %361 : vector<8x32xf32>
    %cst_164 = arith.constant 1.000000e+00 : f32
    %363 = vector.broadcast %cst_164 : f32 to vector<8x32xf32>
    %364 = arith.addf %363, %362 : vector<8x32xf32>
    %365 = arith.divf %363, %364 : vector<8x32xf32>
    %366 = vector.extract_strided_slice %353 {offsets = [0, 64], sizes = [8, 32], strides = [1, 1]} : vector<8x256xf32> to vector<8x32xf32>
    %367 = math.tanh %366 : vector<8x32xf32>
    %368 = vector.extract_strided_slice %353 {offsets = [0, 96], sizes = [8, 32], strides = [1, 1]} : vector<8x256xf32> to vector<8x32xf32>
    %369 = arith.negf %368 : vector<8x32xf32>
    %370 = math.exp %369 : vector<8x32xf32>
    %cst_165 = arith.constant 1.000000e+00 : f32
    %371 = vector.broadcast %cst_165 : f32 to vector<8x32xf32>
    %372 = arith.addf %371, %370 : vector<8x32xf32>
    %373 = arith.divf %371, %372 : vector<8x32xf32>
    %374 = vector.extract_strided_slice %353 {offsets = [0, 128], sizes = [8, 32], strides = [1, 1]} : vector<8x256xf32> to vector<8x32xf32>
    %375 = arith.negf %374 : vector<8x32xf32>
    %376 = math.exp %375 : vector<8x32xf32>
    %cst_166 = arith.constant 1.000000e+00 : f32
    %377 = vector.broadcast %cst_166 : f32 to vector<8x32xf32>
    %378 = arith.addf %377, %376 : vector<8x32xf32>
    %379 = arith.divf %377, %378 : vector<8x32xf32>
    %380 = vector.extract_strided_slice %353 {offsets = [0, 160], sizes = [8, 32], strides = [1, 1]} : vector<8x256xf32> to vector<8x32xf32>
    %381 = arith.negf %380 : vector<8x32xf32>
    %382 = math.exp %381 : vector<8x32xf32>
    %cst_167 = arith.constant 1.000000e+00 : f32
    %383 = vector.broadcast %cst_167 : f32 to vector<8x32xf32>
    %384 = arith.addf %383, %382 : vector<8x32xf32>
    %385 = arith.divf %383, %384 : vector<8x32xf32>
    %386 = vector.extract_strided_slice %353 {offsets = [0, 192], sizes = [8, 32], strides = [1, 1]} : vector<8x256xf32> to vector<8x32xf32>
    %387 = math.tanh %386 : vector<8x32xf32>
    %388 = vector.extract_strided_slice %353 {offsets = [0, 224], sizes = [8, 32], strides = [1, 1]} : vector<8x256xf32> to vector<8x32xf32>
    %389 = arith.negf %388 : vector<8x32xf32>
    %390 = math.exp %389 : vector<8x32xf32>
    %cst_168 = arith.constant 1.000000e+00 : f32
    %391 = vector.broadcast %cst_168 : f32 to vector<8x32xf32>
    %392 = arith.addf %391, %390 : vector<8x32xf32>
    %393 = arith.divf %391, %392 : vector<8x32xf32>
    %c0_169 = arith.constant 0 : index
    %c0_170 = arith.constant 0 : index
    %394 = vector.load %arg7[%c0_169, %c0_170] : memref<8x32xf32, #tpu.memory_space<vmem>>, vector<8x32xf32>
    %395 = arith.mulf %365, %394 : vector<8x32xf32>
    %396 = arith.mulf %359, %367 : vector<8x32xf32>
    %397 = arith.addf %395, %396 : vector<8x32xf32>
    %c0_171 = arith.constant 0 : index
    %c0_172 = arith.constant 0 : index
    %398 = vector.load %arg8[%c0_171, %c0_172] : memref<8x32xf32, #tpu.memory_space<vmem>>, vector<8x32xf32>
    %399 = arith.mulf %385, %398 : vector<8x32xf32>
    %400 = arith.mulf %379, %387 : vector<8x32xf32>
    %401 = arith.addf %399, %400 : vector<8x32xf32>
    %402 = math.tanh %397 : vector<8x32xf32>
    %403 = arith.mulf %373, %402 : vector<8x32xf32>
    %404 = math.tanh %401 : vector<8x32xf32>
    %405 = arith.mulf %393, %404 : vector<8x32xf32>
    %c0_173 = arith.constant 0 : index
    %c0_174 = arith.constant 0 : index
    %406 = vector.load %arg7[%c0_173, %c0_174] : memref<8x32xf32, #tpu.memory_space<vmem>>, vector<8x32xf32>
    tpu.vector_store %arg7[%c0_173, %c0_174], %397 {strides = array<i32>} : memref<8x32xf32, #tpu.memory_space<vmem>>, vector<8x32xf32>,
    %c0_175 = arith.constant 0 : index
    %c0_176 = arith.constant 0 : index
    %407 = vector.load %arg8[%c0_175, %c0_176] : memref<8x32xf32, #tpu.memory_space<vmem>>, vector<8x32xf32>
    tpu.vector_store %arg8[%c0_175, %c0_176], %401 {strides = array<i32>} : memref<8x32xf32, #tpu.memory_space<vmem>>, vector<8x32xf32>,
    %408 = tpu.concatenate %403, %405 in 1 : vector<8x32xf32>, vector<8x32xf32> -> vector<8x64xf32>
    %c0_177 = arith.constant 0 : index
    %c0_178 = arith.constant 0 : index
    %409 = vector.load %arg6[%c0_177, %c0_178] : memref<8x64xf32, #tpu.memory_space<vmem>>, vector<8x64xf32>
    tpu.vector_store %arg6[%c0_177, %c0_178], %408 {strides = array<i32>} : memref<8x64xf32, #tpu.memory_space<vmem>>, vector<8x64xf32>,
    %410 = arith.index_cast %c4_i32 : i32 to index
    %c0_179 = arith.constant 0 : index
    %c0_180 = arith.constant 0 : index
    %411 = vector.load %arg2[%410, %c0_179, %c0_180] : memref<8x8x1xf32, #tpu.memory_space<vmem>>, vector<1x8x1xf32>
    %412 = vector.shape_cast %411 : vector<1x8x1xf32> to vector<8x1xf32>
    %413 = arith.index_cast %c4_i32 : i32 to index
    %c0_181 = arith.constant 0 : index
    %c0_182 = arith.constant 0 : index
    %414 = vector.load %arg3[%413, %c0_181, %c0_182] : memref<8x8x1xf32, #tpu.memory_space<vmem>>, vector<1x8x1xf32>
    %415 = vector.shape_cast %414 : vector<1x8x1xf32> to vector<8x1xf32>
    %cst_183 = arith.constant 0.000000e+00 : f32
    %416 = vector.broadcast %cst_183 : f32 to vector<8x1xf32>
    %417 = arith.cmpf ogt, %412, %416 : vector<8x1xf32>
    %c0_184 = arith.constant 0 : index
    %c0_185 = arith.constant 0 : index
    %418 = vector.load %arg9[%c0_184, %c0_185] : memref<8x32xf32, #tpu.memory_space<vmem>>, vector<8x32xf32>
    %419 = arith.maximumf %418, %403 : vector<8x32xf32>
    %c0_186 = arith.constant 0 : index
    %c0_187 = arith.constant 0 : index
    %420 = vector.load %arg9[%c0_186, %c0_187] : memref<8x32xf32, #tpu.memory_space<vmem>>, vector<8x32xf32>
    %421 = vector.shape_cast %417 : vector<8x1xi1> to vector<8x1xi1>
    %422 = vector.broadcast %421 : vector<8x1xi1> to vector<8x32xi1>
    %423 = arith.select %422, %419, %420 : vector<8x32xi1>, vector<8x32xf32>
    %c0_188 = arith.constant 0 : index
    %c0_189 = arith.constant 0 : index
    %424 = vector.load %arg9[%c0_188, %c0_189] : memref<8x32xf32, #tpu.memory_space<vmem>>, vector<8x32xf32>
    tpu.vector_store %arg9[%c0_188, %c0_189], %423 {strides = array<i32>} : memref<8x32xf32, #tpu.memory_space<vmem>>, vector<8x32xf32>,
    %cst_190 = arith.constant 0.000000e+00 : f32
    %425 = vector.broadcast %cst_190 : f32 to vector<8x1xf32>
    %426 = arith.cmpf ogt, %415, %425 : vector<8x1xf32>
    %c0_191 = arith.constant 0 : index
    %c0_192 = arith.constant 0 : index
    %427 = vector.load %arg10[%c0_191, %c0_192] : memref<8x32xf32, #tpu.memory_space<vmem>>, vector<8x32xf32>
    %428 = arith.maximumf %427, %405 : vector<8x32xf32>
    %c0_193 = arith.constant 0 : index
    %c0_194 = arith.constant 0 : index
    %429 = vector.load %arg10[%c0_193, %c0_194] : memref<8x32xf32, #tpu.memory_space<vmem>>, vector<8x32xf32>
    %430 = vector.shape_cast %426 : vector<8x1xi1> to vector<8x1xi1>
    %431 = vector.broadcast %430 : vector<8x1xi1> to vector<8x32xi1>
    %432 = arith.select %431, %428, %429 : vector<8x32xi1>, vector<8x32xf32>
    %c0_195 = arith.constant 0 : index
    %c0_196 = arith.constant 0 : index
    %433 = vector.load %arg10[%c0_195, %c0_196] : memref<8x32xf32, #tpu.memory_space<vmem>>, vector<8x32xf32>
    tpu.vector_store %arg10[%c0_195, %c0_196], %432 {strides = array<i32>} : memref<8x32xf32, #tpu.memory_space<vmem>>, vector<8x32xf32>,
    %c5_i32 = arith.constant 5 : i32
    %434 = arith.index_cast %c5_i32 : i32 to index
    %c0_197 = arith.constant 0 : index
    %c0_198 = arith.constant 0 : index
    %435 = vector.load %arg1[%434, %c0_197, %c0_198] : memref<8x8x256xf32, #tpu.memory_space<vmem>>, vector<1x8x256xf32>
    %436 = vector.shape_cast %435 : vector<1x8x256xf32> to vector<8x256xf32>
    %c0_199 = arith.constant 0 : index
    %c0_200 = arith.constant 0 : index
    %437 = vector.load %arg6[%c0_199, %c0_200] : memref<8x64xf32, #tpu.memory_space<vmem>>, vector<8x64xf32>
    %cst_201 = arith.constant dense<0.000000e+00> : vector<8x256xf32>
    %438 = tpu.matmul %437, %3, %cst_201 {dimension_numbers = #tpu.dot_dimension_numbers<[1], [0], [0], [1], [0, 0, 1, 1], [], []>} : vector<8x64xf32>, vector<64x256xf32>, vector<8x256xf32> -> vector<8x256xf32>
    %439 = arith.addf %436, %438 : vector<8x256xf32>
    %440 = vector.extract_strided_slice %439 {offsets = [0, 0], sizes = [8, 32], strides = [1, 1]} : vector<8x256xf32> to vector<8x32xf32>
    %441 = arith.negf %440 : vector<8x32xf32>
    %442 = math.exp %441 : vector<8x32xf32>
    %cst_202 = arith.constant 1.000000e+00 : f32
    %443 = vector.broadcast %cst_202 : f32 to vector<8x32xf32>
    %444 = arith.addf %443, %442 : vector<8x32xf32>
    %445 = arith.divf %443, %444 : vector<8x32xf32>
    %446 = vector.extract_strided_slice %439 {offsets = [0, 32], sizes = [8, 32], strides = [1, 1]} : vector<8x256xf32> to vector<8x32xf32>
    %447 = arith.negf %446 : vector<8x32xf32>
    %448 = math.exp %447 : vector<8x32xf32>
    %cst_203 = arith.constant 1.000000e+00 : f32
    %449 = vector.broadcast %cst_203 : f32 to vector<8x32xf32>
    %450 = arith.addf %449, %448 : vector<8x32xf32>
    %451 = arith.divf %449, %450 : vector<8x32xf32>
    %452 = vector.extract_strided_slice %439 {offsets = [0, 64], sizes = [8, 32], strides = [1, 1]} : vector<8x256xf32> to vector<8x32xf32>
    %453 = math.tanh %452 : vector<8x32xf32>
    %454 = vector.extract_strided_slice %439 {offsets = [0, 96], sizes = [8, 32], strides = [1, 1]} : vector<8x256xf32> to vector<8x32xf32>
    %455 = arith.negf %454 : vector<8x32xf32>
    %456 = math.exp %455 : vector<8x32xf32>
    %cst_204 = arith.constant 1.000000e+00 : f32
    %457 = vector.broadcast %cst_204 : f32 to vector<8x32xf32>
    %458 = arith.addf %457, %456 : vector<8x32xf32>
    %459 = arith.divf %457, %458 : vector<8x32xf32>
    %460 = vector.extract_strided_slice %439 {offsets = [0, 128], sizes = [8, 32], strides = [1, 1]} : vector<8x256xf32> to vector<8x32xf32>
    %461 = arith.negf %460 : vector<8x32xf32>
    %462 = math.exp %461 : vector<8x32xf32>
    %cst_205 = arith.constant 1.000000e+00 : f32
    %463 = vector.broadcast %cst_205 : f32 to vector<8x32xf32>
    %464 = arith.addf %463, %462 : vector<8x32xf32>
    %465 = arith.divf %463, %464 : vector<8x32xf32>
    %466 = vector.extract_strided_slice %439 {offsets = [0, 160], sizes = [8, 32], strides = [1, 1]} : vector<8x256xf32> to vector<8x32xf32>
    %467 = arith.negf %466 : vector<8x32xf32>
    %468 = math.exp %467 : vector<8x32xf32>
    %cst_206 = arith.constant 1.000000e+00 : f32
    %469 = vector.broadcast %cst_206 : f32 to vector<8x32xf32>
    %470 = arith.addf %469, %468 : vector<8x32xf32>
    %471 = arith.divf %469, %470 : vector<8x32xf32>
    %472 = vector.extract_strided_slice %439 {offsets = [0, 192], sizes = [8, 32], strides = [1, 1]} : vector<8x256xf32> to vector<8x32xf32>
    %473 = math.tanh %472 : vector<8x32xf32>
    %474 = vector.extract_strided_slice %439 {offsets = [0, 224], sizes = [8, 32], strides = [1, 1]} : vector<8x256xf32> to vector<8x32xf32>
    %475 = arith.negf %474 : vector<8x32xf32>
    %476 = math.exp %475 : vector<8x32xf32>
    %cst_207 = arith.constant 1.000000e+00 : f32
    %477 = vector.broadcast %cst_207 : f32 to vector<8x32xf32>
    %478 = arith.addf %477, %476 : vector<8x32xf32>
    %479 = arith.divf %477, %478 : vector<8x32xf32>
    %c0_208 = arith.constant 0 : index
    %c0_209 = arith.constant 0 : index
    %480 = vector.load %arg7[%c0_208, %c0_209] : memref<8x32xf32, #tpu.memory_space<vmem>>, vector<8x32xf32>
    %481 = arith.mulf %451, %480 : vector<8x32xf32>
    %482 = arith.mulf %445, %453 : vector<8x32xf32>
    %483 = arith.addf %481, %482 : vector<8x32xf32>
    %c0_210 = arith.constant 0 : index
    %c0_211 = arith.constant 0 : index
    %484 = vector.load %arg8[%c0_210, %c0_211] : memref<8x32xf32, #tpu.memory_space<vmem>>, vector<8x32xf32>
    %485 = arith.mulf %471, %484 : vector<8x32xf32>
    %486 = arith.mulf %465, %473 : vector<8x32xf32>
    %487 = arith.addf %485, %486 : vector<8x32xf32>
    %488 = math.tanh %483 : vector<8x32xf32>
    %489 = arith.mulf %459, %488 : vector<8x32xf32>
    %490 = math.tanh %487 : vector<8x32xf32>
    %491 = arith.mulf %479, %490 : vector<8x32xf32>
    %c0_212 = arith.constant 0 : index
    %c0_213 = arith.constant 0 : index
    %492 = vector.load %arg7[%c0_212, %c0_213] : memref<8x32xf32, #tpu.memory_space<vmem>>, vector<8x32xf32>
    tpu.vector_store %arg7[%c0_212, %c0_213], %483 {strides = array<i32>} : memref<8x32xf32, #tpu.memory_space<vmem>>, vector<8x32xf32>,
    %c0_214 = arith.constant 0 : index
    %c0_215 = arith.constant 0 : index
    %493 = vector.load %arg8[%c0_214, %c0_215] : memref<8x32xf32, #tpu.memory_space<vmem>>, vector<8x32xf32>
    tpu.vector_store %arg8[%c0_214, %c0_215], %487 {strides = array<i32>} : memref<8x32xf32, #tpu.memory_space<vmem>>, vector<8x32xf32>,
    %494 = tpu.concatenate %489, %491 in 1 : vector<8x32xf32>, vector<8x32xf32> -> vector<8x64xf32>
    %c0_216 = arith.constant 0 : index
    %c0_217 = arith.constant 0 : index
    %495 = vector.load %arg6[%c0_216, %c0_217] : memref<8x64xf32, #tpu.memory_space<vmem>>, vector<8x64xf32>
    tpu.vector_store %arg6[%c0_216, %c0_217], %494 {strides = array<i32>} : memref<8x64xf32, #tpu.memory_space<vmem>>, vector<8x64xf32>,
    %496 = arith.index_cast %c5_i32 : i32 to index
    %c0_218 = arith.constant 0 : index
    %c0_219 = arith.constant 0 : index
    %497 = vector.load %arg2[%496, %c0_218, %c0_219] : memref<8x8x1xf32, #tpu.memory_space<vmem>>, vector<1x8x1xf32>
    %498 = vector.shape_cast %497 : vector<1x8x1xf32> to vector<8x1xf32>
    %499 = arith.index_cast %c5_i32 : i32 to index
    %c0_220 = arith.constant 0 : index
    %c0_221 = arith.constant 0 : index
    %500 = vector.load %arg3[%499, %c0_220, %c0_221] : memref<8x8x1xf32, #tpu.memory_space<vmem>>, vector<1x8x1xf32>
    %501 = vector.shape_cast %500 : vector<1x8x1xf32> to vector<8x1xf32>
    %cst_222 = arith.constant 0.000000e+00 : f32
    %502 = vector.broadcast %cst_222 : f32 to vector<8x1xf32>
    %503 = arith.cmpf ogt, %498, %502 : vector<8x1xf32>
    %c0_223 = arith.constant 0 : index
    %c0_224 = arith.constant 0 : index
    %504 = vector.load %arg9[%c0_223, %c0_224] : memref<8x32xf32, #tpu.memory_space<vmem>>, vector<8x32xf32>
    %505 = arith.maximumf %504, %489 : vector<8x32xf32>
    %c0_225 = arith.constant 0 : index
    %c0_226 = arith.constant 0 : index
    %506 = vector.load %arg9[%c0_225, %c0_226] : memref<8x32xf32, #tpu.memory_space<vmem>>, vector<8x32xf32>
    %507 = vector.shape_cast %503 : vector<8x1xi1> to vector<8x1xi1>
    %508 = vector.broadcast %507 : vector<8x1xi1> to vector<8x32xi1>
    %509 = arith.select %508, %505, %506 : vector<8x32xi1>, vector<8x32xf32>
    %c0_227 = arith.constant 0 : index
    %c0_228 = arith.constant 0 : index
    %510 = vector.load %arg9[%c0_227, %c0_228] : memref<8x32xf32, #tpu.memory_space<vmem>>, vector<8x32xf32>
    tpu.vector_store %arg9[%c0_227, %c0_228], %509 {strides = array<i32>} : memref<8x32xf32, #tpu.memory_space<vmem>>, vector<8x32xf32>,
    %cst_229 = arith.constant 0.000000e+00 : f32
    %511 = vector.broadcast %cst_229 : f32 to vector<8x1xf32>
    %512 = arith.cmpf ogt, %501, %511 : vector<8x1xf32>
    %c0_230 = arith.constant 0 : index
    %c0_231 = arith.constant 0 : index
    %513 = vector.load %arg10[%c0_230, %c0_231] : memref<8x32xf32, #tpu.memory_space<vmem>>, vector<8x32xf32>
    %514 = arith.maximumf %513, %491 : vector<8x32xf32>
    %c0_232 = arith.constant 0 : index
    %c0_233 = arith.constant 0 : index
    %515 = vector.load %arg10[%c0_232, %c0_233] : memref<8x32xf32, #tpu.memory_space<vmem>>, vector<8x32xf32>
    %516 = vector.shape_cast %512 : vector<8x1xi1> to vector<8x1xi1>
    %517 = vector.broadcast %516 : vector<8x1xi1> to vector<8x32xi1>
    %518 = arith.select %517, %514, %515 : vector<8x32xi1>, vector<8x32xf32>
    %c0_234 = arith.constant 0 : index
    %c0_235 = arith.constant 0 : index
    %519 = vector.load %arg10[%c0_234, %c0_235] : memref<8x32xf32, #tpu.memory_space<vmem>>, vector<8x32xf32>
    tpu.vector_store %arg10[%c0_234, %c0_235], %518 {strides = array<i32>} : memref<8x32xf32, #tpu.memory_space<vmem>>, vector<8x32xf32>,
    %c6_i32 = arith.constant 6 : i32
    %520 = arith.index_cast %c6_i32 : i32 to index
    %c0_236 = arith.constant 0 : index
    %c0_237 = arith.constant 0 : index
    %521 = vector.load %arg1[%520, %c0_236, %c0_237] : memref<8x8x256xf32, #tpu.memory_space<vmem>>, vector<1x8x256xf32>
    %522 = vector.shape_cast %521 : vector<1x8x256xf32> to vector<8x256xf32>
    %c0_238 = arith.constant 0 : index
    %c0_239 = arith.constant 0 : index
    %523 = vector.load %arg6[%c0_238, %c0_239] : memref<8x64xf32, #tpu.memory_space<vmem>>, vector<8x64xf32>
    %cst_240 = arith.constant dense<0.000000e+00> : vector<8x256xf32>
    %524 = tpu.matmul %523, %3, %cst_240 {dimension_numbers = #tpu.dot_dimension_numbers<[1], [0], [0], [1], [0, 0, 1, 1], [], []>} : vector<8x64xf32>, vector<64x256xf32>, vector<8x256xf32> -> vector<8x256xf32>
    %525 = arith.addf %522, %524 : vector<8x256xf32>
    %526 = vector.extract_strided_slice %525 {offsets = [0, 0], sizes = [8, 32], strides = [1, 1]} : vector<8x256xf32> to vector<8x32xf32>
    %527 = arith.negf %526 : vector<8x32xf32>
    %528 = math.exp %527 : vector<8x32xf32>
    %cst_241 = arith.constant 1.000000e+00 : f32
    %529 = vector.broadcast %cst_241 : f32 to vector<8x32xf32>
    %530 = arith.addf %529, %528 : vector<8x32xf32>
    %531 = arith.divf %529, %530 : vector<8x32xf32>
    %532 = vector.extract_strided_slice %525 {offsets = [0, 32], sizes = [8, 32], strides = [1, 1]} : vector<8x256xf32> to vector<8x32xf32>
    %533 = arith.negf %532 : vector<8x32xf32>
    %534 = math.exp %533 : vector<8x32xf32>
    %cst_242 = arith.constant 1.000000e+00 : f32
    %535 = vector.broadcast %cst_242 : f32 to vector<8x32xf32>
    %536 = arith.addf %535, %534 : vector<8x32xf32>
    %537 = arith.divf %535, %536 : vector<8x32xf32>
    %538 = vector.extract_strided_slice %525 {offsets = [0, 64], sizes = [8, 32], strides = [1, 1]} : vector<8x256xf32> to vector<8x32xf32>
    %539 = math.tanh %538 : vector<8x32xf32>
    %540 = vector.extract_strided_slice %525 {offsets = [0, 96], sizes = [8, 32], strides = [1, 1]} : vector<8x256xf32> to vector<8x32xf32>
    %541 = arith.negf %540 : vector<8x32xf32>
    %542 = math.exp %541 : vector<8x32xf32>
    %cst_243 = arith.constant 1.000000e+00 : f32
    %543 = vector.broadcast %cst_243 : f32 to vector<8x32xf32>
    %544 = arith.addf %543, %542 : vector<8x32xf32>
    %545 = arith.divf %543, %544 : vector<8x32xf32>
    %546 = vector.extract_strided_slice %525 {offsets = [0, 128], sizes = [8, 32], strides = [1, 1]} : vector<8x256xf32> to vector<8x32xf32>
    %547 = arith.negf %546 : vector<8x32xf32>
    %548 = math.exp %547 : vector<8x32xf32>
    %cst_244 = arith.constant 1.000000e+00 : f32
    %549 = vector.broadcast %cst_244 : f32 to vector<8x32xf32>
    %550 = arith.addf %549, %548 : vector<8x32xf32>
    %551 = arith.divf %549, %550 : vector<8x32xf32>
    %552 = vector.extract_strided_slice %525 {offsets = [0, 160], sizes = [8, 32], strides = [1, 1]} : vector<8x256xf32> to vector<8x32xf32>
    %553 = arith.negf %552 : vector<8x32xf32>
    %554 = math.exp %553 : vector<8x32xf32>
    %cst_245 = arith.constant 1.000000e+00 : f32
    %555 = vector.broadcast %cst_245 : f32 to vector<8x32xf32>
    %556 = arith.addf %555, %554 : vector<8x32xf32>
    %557 = arith.divf %555, %556 : vector<8x32xf32>
    %558 = vector.extract_strided_slice %525 {offsets = [0, 192], sizes = [8, 32], strides = [1, 1]} : vector<8x256xf32> to vector<8x32xf32>
    %559 = math.tanh %558 : vector<8x32xf32>
    %560 = vector.extract_strided_slice %525 {offsets = [0, 224], sizes = [8, 32], strides = [1, 1]} : vector<8x256xf32> to vector<8x32xf32>
    %561 = arith.negf %560 : vector<8x32xf32>
    %562 = math.exp %561 : vector<8x32xf32>
    %cst_246 = arith.constant 1.000000e+00 : f32
    %563 = vector.broadcast %cst_246 : f32 to vector<8x32xf32>
    %564 = arith.addf %563, %562 : vector<8x32xf32>
    %565 = arith.divf %563, %564 : vector<8x32xf32>
    %c0_247 = arith.constant 0 : index
    %c0_248 = arith.constant 0 : index
    %566 = vector.load %arg7[%c0_247, %c0_248] : memref<8x32xf32, #tpu.memory_space<vmem>>, vector<8x32xf32>
    %567 = arith.mulf %537, %566 : vector<8x32xf32>
    %568 = arith.mulf %531, %539 : vector<8x32xf32>
    %569 = arith.addf %567, %568 : vector<8x32xf32>
    %c0_249 = arith.constant 0 : index
    %c0_250 = arith.constant 0 : index
    %570 = vector.load %arg8[%c0_249, %c0_250] : memref<8x32xf32, #tpu.memory_space<vmem>>, vector<8x32xf32>
    %571 = arith.mulf %557, %570 : vector<8x32xf32>
    %572 = arith.mulf %551, %559 : vector<8x32xf32>
    %573 = arith.addf %571, %572 : vector<8x32xf32>
    %574 = math.tanh %569 : vector<8x32xf32>
    %575 = arith.mulf %545, %574 : vector<8x32xf32>
    %576 = math.tanh %573 : vector<8x32xf32>
    %577 = arith.mulf %565, %576 : vector<8x32xf32>
    %c0_251 = arith.constant 0 : index
    %c0_252 = arith.constant 0 : index
    %578 = vector.load %arg7[%c0_251, %c0_252] : memref<8x32xf32, #tpu.memory_space<vmem>>, vector<8x32xf32>
    tpu.vector_store %arg7[%c0_251, %c0_252], %569 {strides = array<i32>} : memref<8x32xf32, #tpu.memory_space<vmem>>, vector<8x32xf32>,
    %c0_253 = arith.constant 0 : index
    %c0_254 = arith.constant 0 : index
    %579 = vector.load %arg8[%c0_253, %c0_254] : memref<8x32xf32, #tpu.memory_space<vmem>>, vector<8x32xf32>
    tpu.vector_store %arg8[%c0_253, %c0_254], %573 {strides = array<i32>} : memref<8x32xf32, #tpu.memory_space<vmem>>, vector<8x32xf32>,
    %580 = tpu.concatenate %575, %577 in 1 : vector<8x32xf32>, vector<8x32xf32> -> vector<8x64xf32>
    %c0_255 = arith.constant 0 : index
    %c0_256 = arith.constant 0 : index
    %581 = vector.load %arg6[%c0_255, %c0_256] : memref<8x64xf32, #tpu.memory_space<vmem>>, vector<8x64xf32>
    tpu.vector_store %arg6[%c0_255, %c0_256], %580 {strides = array<i32>} : memref<8x64xf32, #tpu.memory_space<vmem>>, vector<8x64xf32>,
    %582 = arith.index_cast %c6_i32 : i32 to index
    %c0_257 = arith.constant 0 : index
    %c0_258 = arith.constant 0 : index
    %583 = vector.load %arg2[%582, %c0_257, %c0_258] : memref<8x8x1xf32, #tpu.memory_space<vmem>>, vector<1x8x1xf32>
    %584 = vector.shape_cast %583 : vector<1x8x1xf32> to vector<8x1xf32>
    %585 = arith.index_cast %c6_i32 : i32 to index
    %c0_259 = arith.constant 0 : index
    %c0_260 = arith.constant 0 : index
    %586 = vector.load %arg3[%585, %c0_259, %c0_260] : memref<8x8x1xf32, #tpu.memory_space<vmem>>, vector<1x8x1xf32>
    %587 = vector.shape_cast %586 : vector<1x8x1xf32> to vector<8x1xf32>
    %cst_261 = arith.constant 0.000000e+00 : f32
    %588 = vector.broadcast %cst_261 : f32 to vector<8x1xf32>
    %589 = arith.cmpf ogt, %584, %588 : vector<8x1xf32>
    %c0_262 = arith.constant 0 : index
    %c0_263 = arith.constant 0 : index
    %590 = vector.load %arg9[%c0_262, %c0_263] : memref<8x32xf32, #tpu.memory_space<vmem>>, vector<8x32xf32>
    %591 = arith.maximumf %590, %575 : vector<8x32xf32>
    %c0_264 = arith.constant 0 : index
    %c0_265 = arith.constant 0 : index
    %592 = vector.load %arg9[%c0_264, %c0_265] : memref<8x32xf32, #tpu.memory_space<vmem>>, vector<8x32xf32>
    %593 = vector.shape_cast %589 : vector<8x1xi1> to vector<8x1xi1>
    %594 = vector.broadcast %593 : vector<8x1xi1> to vector<8x32xi1>
    %595 = arith.select %594, %591, %592 : vector<8x32xi1>, vector<8x32xf32>
    %c0_266 = arith.constant 0 : index
    %c0_267 = arith.constant 0 : index
    %596 = vector.load %arg9[%c0_266, %c0_267] : memref<8x32xf32, #tpu.memory_space<vmem>>, vector<8x32xf32>
    tpu.vector_store %arg9[%c0_266, %c0_267], %595 {strides = array<i32>} : memref<8x32xf32, #tpu.memory_space<vmem>>, vector<8x32xf32>,
    %cst_268 = arith.constant 0.000000e+00 : f32
    %597 = vector.broadcast %cst_268 : f32 to vector<8x1xf32>
    %598 = arith.cmpf ogt, %587, %597 : vector<8x1xf32>
    %c0_269 = arith.constant 0 : index
    %c0_270 = arith.constant 0 : index
    %599 = vector.load %arg10[%c0_269, %c0_270] : memref<8x32xf32, #tpu.memory_space<vmem>>, vector<8x32xf32>
    %600 = arith.maximumf %599, %577 : vector<8x32xf32>
    %c0_271 = arith.constant 0 : index
    %c0_272 = arith.constant 0 : index
    %601 = vector.load %arg10[%c0_271, %c0_272] : memref<8x32xf32, #tpu.memory_space<vmem>>, vector<8x32xf32>
    %602 = vector.shape_cast %598 : vector<8x1xi1> to vector<8x1xi1>
    %603 = vector.broadcast %602 : vector<8x1xi1> to vector<8x32xi1>
    %604 = arith.select %603, %600, %601 : vector<8x32xi1>, vector<8x32xf32>
    %c0_273 = arith.constant 0 : index
    %c0_274 = arith.constant 0 : index
    %605 = vector.load %arg10[%c0_273, %c0_274] : memref<8x32xf32, #tpu.memory_space<vmem>>, vector<8x32xf32>
    tpu.vector_store %arg10[%c0_273, %c0_274], %604 {strides = array<i32>} : memref<8x32xf32, #tpu.memory_space<vmem>>, vector<8x32xf32>,
    %c7_i32 = arith.constant 7 : i32
    %606 = arith.index_cast %c7_i32 : i32 to index
    %c0_275 = arith.constant 0 : index
    %c0_276 = arith.constant 0 : index
    %607 = vector.load %arg1[%606, %c0_275, %c0_276] : memref<8x8x256xf32, #tpu.memory_space<vmem>>, vector<1x8x256xf32>
    %608 = vector.shape_cast %607 : vector<1x8x256xf32> to vector<8x256xf32>
    %c0_277 = arith.constant 0 : index
    %c0_278 = arith.constant 0 : index
    %609 = vector.load %arg6[%c0_277, %c0_278] : memref<8x64xf32, #tpu.memory_space<vmem>>, vector<8x64xf32>
    %cst_279 = arith.constant dense<0.000000e+00> : vector<8x256xf32>
    %610 = tpu.matmul %609, %3, %cst_279 {dimension_numbers = #tpu.dot_dimension_numbers<[1], [0], [0], [1], [0, 0, 1, 1], [], []>} : vector<8x64xf32>, vector<64x256xf32>, vector<8x256xf32> -> vector<8x256xf32>
    %611 = arith.addf %608, %610 : vector<8x256xf32>
    %612 = vector.extract_strided_slice %611 {offsets = [0, 0], sizes = [8, 32], strides = [1, 1]} : vector<8x256xf32> to vector<8x32xf32>
    %613 = arith.negf %612 : vector<8x32xf32>
    %614 = math.exp %613 : vector<8x32xf32>
    %cst_280 = arith.constant 1.000000e+00 : f32
    %615 = vector.broadcast %cst_280 : f32 to vector<8x32xf32>
    %616 = arith.addf %615, %614 : vector<8x32xf32>
    %617 = arith.divf %615, %616 : vector<8x32xf32>
    %618 = vector.extract_strided_slice %611 {offsets = [0, 32], sizes = [8, 32], strides = [1, 1]} : vector<8x256xf32> to vector<8x32xf32>
    %619 = arith.negf %618 : vector<8x32xf32>
    %620 = math.exp %619 : vector<8x32xf32>
    %cst_281 = arith.constant 1.000000e+00 : f32
    %621 = vector.broadcast %cst_281 : f32 to vector<8x32xf32>
    %622 = arith.addf %621, %620 : vector<8x32xf32>
    %623 = arith.divf %621, %622 : vector<8x32xf32>
    %624 = vector.extract_strided_slice %611 {offsets = [0, 64], sizes = [8, 32], strides = [1, 1]} : vector<8x256xf32> to vector<8x32xf32>
    %625 = math.tanh %624 : vector<8x32xf32>
    %626 = vector.extract_strided_slice %611 {offsets = [0, 96], sizes = [8, 32], strides = [1, 1]} : vector<8x256xf32> to vector<8x32xf32>
    %627 = arith.negf %626 : vector<8x32xf32>
    %628 = math.exp %627 : vector<8x32xf32>
    %cst_282 = arith.constant 1.000000e+00 : f32
    %629 = vector.broadcast %cst_282 : f32 to vector<8x32xf32>
    %630 = arith.addf %629, %628 : vector<8x32xf32>
    %631 = arith.divf %629, %630 : vector<8x32xf32>
    %632 = vector.extract_strided_slice %611 {offsets = [0, 128], sizes = [8, 32], strides = [1, 1]} : vector<8x256xf32> to vector<8x32xf32>
    %633 = arith.negf %632 : vector<8x32xf32>
    %634 = math.exp %633 : vector<8x32xf32>
    %cst_283 = arith.constant 1.000000e+00 : f32
    %635 = vector.broadcast %cst_283 : f32 to vector<8x32xf32>
    %636 = arith.addf %635, %634 : vector<8x32xf32>
    %637 = arith.divf %635, %636 : vector<8x32xf32>
    %638 = vector.extract_strided_slice %611 {offsets = [0, 160], sizes = [8, 32], strides = [1, 1]} : vector<8x256xf32> to vector<8x32xf32>
    %639 = arith.negf %638 : vector<8x32xf32>
    %640 = math.exp %639 : vector<8x32xf32>
    %cst_284 = arith.constant 1.000000e+00 : f32
    %641 = vector.broadcast %cst_284 : f32 to vector<8x32xf32>
    %642 = arith.addf %641, %640 : vector<8x32xf32>
    %643 = arith.divf %641, %642 : vector<8x32xf32>
    %644 = vector.extract_strided_slice %611 {offsets = [0, 192], sizes = [8, 32], strides = [1, 1]} : vector<8x256xf32> to vector<8x32xf32>
    %645 = math.tanh %644 : vector<8x32xf32>
    %646 = vector.extract_strided_slice %611 {offsets = [0, 224], sizes = [8, 32], strides = [1, 1]} : vector<8x256xf32> to vector<8x32xf32>
    %647 = arith.negf %646 : vector<8x32xf32>
    %648 = math.exp %647 : vector<8x32xf32>
    %cst_285 = arith.constant 1.000000e+00 : f32
    %649 = vector.broadcast %cst_285 : f32 to vector<8x32xf32>
    %650 = arith.addf %649, %648 : vector<8x32xf32>
    %651 = arith.divf %649, %650 : vector<8x32xf32>
    %c0_286 = arith.constant 0 : index
    %c0_287 = arith.constant 0 : index
    %652 = vector.load %arg7[%c0_286, %c0_287] : memref<8x32xf32, #tpu.memory_space<vmem>>, vector<8x32xf32>
    %653 = arith.mulf %623, %652 : vector<8x32xf32>
    %654 = arith.mulf %617, %625 : vector<8x32xf32>
    %655 = arith.addf %653, %654 : vector<8x32xf32>
    %c0_288 = arith.constant 0 : index
    %c0_289 = arith.constant 0 : index
    %656 = vector.load %arg8[%c0_288, %c0_289] : memref<8x32xf32, #tpu.memory_space<vmem>>, vector<8x32xf32>
    %657 = arith.mulf %643, %656 : vector<8x32xf32>
    %658 = arith.mulf %637, %645 : vector<8x32xf32>
    %659 = arith.addf %657, %658 : vector<8x32xf32>
    %660 = math.tanh %655 : vector<8x32xf32>
    %661 = arith.mulf %631, %660 : vector<8x32xf32>
    %662 = math.tanh %659 : vector<8x32xf32>
    %663 = arith.mulf %651, %662 : vector<8x32xf32>
    %c0_290 = arith.constant 0 : index
    %c0_291 = arith.constant 0 : index
    %664 = vector.load %arg7[%c0_290, %c0_291] : memref<8x32xf32, #tpu.memory_space<vmem>>, vector<8x32xf32>
    tpu.vector_store %arg7[%c0_290, %c0_291], %655 {strides = array<i32>} : memref<8x32xf32, #tpu.memory_space<vmem>>, vector<8x32xf32>,
    %c0_292 = arith.constant 0 : index
    %c0_293 = arith.constant 0 : index
    %665 = vector.load %arg8[%c0_292, %c0_293] : memref<8x32xf32, #tpu.memory_space<vmem>>, vector<8x32xf32>
    tpu.vector_store %arg8[%c0_292, %c0_293], %659 {strides = array<i32>} : memref<8x32xf32, #tpu.memory_space<vmem>>, vector<8x32xf32>,
    %666 = tpu.concatenate %661, %663 in 1 : vector<8x32xf32>, vector<8x32xf32> -> vector<8x64xf32>
    %c0_294 = arith.constant 0 : index
    %c0_295 = arith.constant 0 : index
    %667 = vector.load %arg6[%c0_294, %c0_295] : memref<8x64xf32, #tpu.memory_space<vmem>>, vector<8x64xf32>
    tpu.vector_store %arg6[%c0_294, %c0_295], %666 {strides = array<i32>} : memref<8x64xf32, #tpu.memory_space<vmem>>, vector<8x64xf32>,
    %668 = arith.index_cast %c7_i32 : i32 to index
    %c0_296 = arith.constant 0 : index
    %c0_297 = arith.constant 0 : index
    %669 = vector.load %arg2[%668, %c0_296, %c0_297] : memref<8x8x1xf32, #tpu.memory_space<vmem>>, vector<1x8x1xf32>
    %670 = vector.shape_cast %669 : vector<1x8x1xf32> to vector<8x1xf32>
    %671 = arith.index_cast %c7_i32 : i32 to index
    %c0_298 = arith.constant 0 : index
    %c0_299 = arith.constant 0 : index
    %672 = vector.load %arg3[%671, %c0_298, %c0_299] : memref<8x8x1xf32, #tpu.memory_space<vmem>>, vector<1x8x1xf32>
    %673 = vector.shape_cast %672 : vector<1x8x1xf32> to vector<8x1xf32>
    %cst_300 = arith.constant 0.000000e+00 : f32
    %674 = vector.broadcast %cst_300 : f32 to vector<8x1xf32>
    %675 = arith.cmpf ogt, %670, %674 : vector<8x1xf32>
    %c0_301 = arith.constant 0 : index
    %c0_302 = arith.constant 0 : index
    %676 = vector.load %arg9[%c0_301, %c0_302] : memref<8x32xf32, #tpu.memory_space<vmem>>, vector<8x32xf32>
    %677 = arith.maximumf %676, %661 : vector<8x32xf32>
    %c0_303 = arith.constant 0 : index
    %c0_304 = arith.constant 0 : index
    %678 = vector.load %arg9[%c0_303, %c0_304] : memref<8x32xf32, #tpu.memory_space<vmem>>, vector<8x32xf32>
    %679 = vector.shape_cast %675 : vector<8x1xi1> to vector<8x1xi1>
    %680 = vector.broadcast %679 : vector<8x1xi1> to vector<8x32xi1>
    %681 = arith.select %680, %677, %678 : vector<8x32xi1>, vector<8x32xf32>
    %c0_305 = arith.constant 0 : index
    %c0_306 = arith.constant 0 : index
    %682 = vector.load %arg9[%c0_305, %c0_306] : memref<8x32xf32, #tpu.memory_space<vmem>>, vector<8x32xf32>
    tpu.vector_store %arg9[%c0_305, %c0_306], %681 {strides = array<i32>} : memref<8x32xf32, #tpu.memory_space<vmem>>, vector<8x32xf32>,
    %cst_307 = arith.constant 0.000000e+00 : f32
    %683 = vector.broadcast %cst_307 : f32 to vector<8x1xf32>
    %684 = arith.cmpf ogt, %673, %683 : vector<8x1xf32>
    %c0_308 = arith.constant 0 : index
    %c0_309 = arith.constant 0 : index
    %685 = vector.load %arg10[%c0_308, %c0_309] : memref<8x32xf32, #tpu.memory_space<vmem>>, vector<8x32xf32>
    %686 = arith.maximumf %685, %663 : vector<8x32xf32>
    %c0_310 = arith.constant 0 : index
    %c0_311 = arith.constant 0 : index
    %687 = vector.load %arg10[%c0_310, %c0_311] : memref<8x32xf32, #tpu.memory_space<vmem>>, vector<8x32xf32>
    %688 = vector.shape_cast %684 : vector<8x1xi1> to vector<8x1xi1>
    %689 = vector.broadcast %688 : vector<8x1xi1> to vector<8x32xi1>
    %690 = arith.select %689, %686, %687 : vector<8x32xi1>, vector<8x32xf32>
    %c0_312 = arith.constant 0 : index
    %c0_313 = arith.constant 0 : index
    %691 = vector.load %arg10[%c0_312, %c0_313] : memref<8x32xf32, #tpu.memory_space<vmem>>, vector<8x32xf32>
    tpu.vector_store %arg10[%c0_312, %c0_313], %690 {strides = array<i32>} : memref<8x32xf32, #tpu.memory_space<vmem>>, vector<8x32xf32>,
    %c8_i32 = arith.constant 8 : i32
    %c0_314 = arith.constant 0 : index
    %c0_315 = arith.constant 0 : index
    %692 = vector.load %arg9[%c0_314, %c0_315] : memref<8x32xf32, #tpu.memory_space<vmem>>, vector<8x32xf32>
    %c0_316 = arith.constant 0 : index
    %c0_317 = arith.constant 0 : index
    %693 = vector.load %arg10[%c0_316, %c0_317] : memref<8x32xf32, #tpu.memory_space<vmem>>, vector<8x32xf32>
    %694 = tpu.concatenate %692, %693 in 1 : vector<8x32xf32>, vector<8x32xf32> -> vector<8x64xf32>
    %c0_318 = arith.constant 0 : index
    %c0_319 = arith.constant 0 : index
    %695 = vector.load %arg5[%c0_318, %c0_319] : memref<8x64xf32, #tpu.memory_space<vmem>>, vector<8x64xf32>
    tpu.vector_store %arg5[%c0_318, %c0_319], %694 {strides = array<i32>} : memref<8x64xf32, #tpu.memory_space<vmem>>, vector<8x64xf32>,
    return
  }
  func.func @transform_0(%arg0: i32) -> (i32, i32, i32) {
    %c0_i32 = arith.constant 0 : i32
    %c0_i32_0 = arith.constant 0 : i32
    %c0_i32_1 = arith.constant 0 : i32
    return %arg0, %c0_i32, %c0_i32_0 : i32, i32, i32
  }
  func.func @transform_1(%arg0: i32) -> (i32, i32, i32) {
    %c0_i32 = arith.constant 0 : i32
    %c0_i32_0 = arith.constant 0 : i32
    %c0_i32_1 = arith.constant 0 : i32
    return %arg0, %c0_i32, %c0_i32_0 : i32, i32, i32
  }
  func.func @transform_2(%arg0: i32) -> (i32, i32, i32) {
    %c0_i32 = arith.constant 0 : i32
    %c0_i32_0 = arith.constant 0 : i32
    %c0_i32_1 = arith.constant 0 : i32
    return %arg0, %c0_i32, %c0_i32_0 : i32, i32, i32
  }
  func.func @transform_3(%arg0: i32) -> (i32, i32) {
    %c0_i32 = arith.constant 0 : i32
    %c0_i32_0 = arith.constant 0 : i32
    %c0_i32_1 = arith.constant 0 : i32
    return %c0_i32, %c0_i32_0 : i32, i32
  }
  func.func @transform_4(%arg0: i32) -> (i32, i32) {
    %c0_i32 = arith.constant 0 : i32
    %c0_i32_0 = arith.constant 0 : i32
    %c0_i32_1 = arith.constant 0 : i32
    return %c0_i32, %c0_i32_0 : i32, i32
  }
}

</mosaic_0001>

<llo_original>
// kernel: tpu_custom_call.1
$region0: #{tpu_custom_call.1}
  #allocation0 [shape = 'u32[]', space=smem, size = 0x4, offset = 0x4, fixed_abs, tag = 'smem constant byte address 0x4 - core index']
  #allocation1 [shape = 'u32[72,128]{1,0:T(1,128)}', space=vmem, size = 0x9000, scoped, tag = 'internal scratch']
  #allocation2 [shape = 'f32[8,64]{1,0:T(8,128)}', space=vmem, size = 0x1000, scoped, tag = 'scratch operand']
  #allocation3 [shape = 'f32[8,32]{1,0:T(8,128)}', space=vmem, size = 0x1000, scoped, tag = 'scratch operand']
  #allocation4 [shape = 'f32[8,32]{1,0:T(8,128)}', space=vmem, size = 0x1000, scoped, tag = 'scratch operand']
  #allocation5 [shape = 'f32[8,32]{1,0:T(8,128)}', space=vmem, size = 0x1000, scoped, tag = 'scratch operand']
  #allocation6 [shape = 'f32[8,32]{1,0:T(8,128)}', space=vmem, size = 0x1000, scoped, tag = 'scratch operand']
  %s0 = inlined_call_operand.vmem [shape: f32[8,8,256], index: 0, kind: input, shape index: {}]
  %s1 = inlined_call_operand.vmem [shape: f32[8,8,1], index: 1, kind: input, shape index: {}]
  %s2 = inlined_call_operand.vmem [shape: f32[8,8,1], index: 2, kind: input, shape index: {}]
  %s3 = inlined_call_operand.hbm [shape: f32[64,256], index: 3, kind: input, shape index: {}]
  %s4 = inlined_call_operand.hbm [shape: f32[8,64], index: 4, kind: output, shape index: {}]
  %s5 = sld [smem:[#allocation0]]
  $region34: #{tpu_custom_call.1} parent=0
    _
  %s7 = ssub.s32 1, %s5
  %s8 = scalar_select 0, %s7, %s5
  $region1: #{tpu_custom_call.1} parent=0
    #allocation7 [shape = 'u8[65536]{0}', space=vmem, size = 0x10000, scoped, tag = 'input window, operand 3, single buffered']
    #allocation8 [shape = 's32[1]{0}', space=sflag, size = 0x4, scoped, tag = 'scoped memory for tpu_custom_call.1']
    #allocation9 [shape = 's32[1]{0}', space=sflag, size = 0x4, scoped, tag = 'scoped memory for tpu_custom_call.1']
    #allocation10 [shape = 'u8[4096]{0}', space=vmem, size = 0x1000, scoped, tag = 'output window, operand 0, single buffered']
    %9 = vsyncpa [#allocation8], 0
    %10 = vsyncpa [#allocation9], 0
    // Predicated region
    $region2: #{tpu_custom_call.1} parent=1 // pred_check
      _
    $region3: #{tpu_custom_call.1} parent=1 // pred_check_branch
      %12 = sbr.rel (0) target = $region5
    $region4: #{tpu_custom_call.1} parent=1 // pred_region
      _
    $region5: #{tpu_custom_call.1} parent=1 // pred_fallthru
      _
    // Predicated region
    $region6: #{tpu_custom_call.1} parent=1 // pred_check
      _
    $region7: #{tpu_custom_call.1} parent=1 // pred_check_branch
      %14 = sbr.rel (0) target = $region9
    $region8: #{tpu_custom_call.1} parent=1 // pred_region
      _
    $region9: #{tpu_custom_call.1} parent=1 // pred_fallthru
      _
    // Predicated region
    $region10: #{tpu_custom_call.1} parent=1 // pred_check
      _
    $region11: #{tpu_custom_call.1} parent=1 // pred_check_branch
      %16 = sbr.rel (0) target = $region13
    $region12: #{tpu_custom_call.1} parent=1 // pred_region
      _
    $region13: #{tpu_custom_call.1} parent=1 // pred_fallthru
      _
    // Predicated region
    $region14: #{tpu_custom_call.1} parent=1 // pred_check
      _
    $region15: #{tpu_custom_call.1} parent=1 // pred_check_branch
      %18 = sbr.rel (0) target = $region17
    $region16: #{tpu_custom_call.1} parent=1 // pred_region
      %20 = vsyncadd [#allocation8], 0
      %s21 = sshll.u32 %s3, 4
      %s22 = int_to_ptr.hbm [resolvable:$true] %s21
      %s23 = sshll.u32 [#allocation7], 4
      %s24 = int_to_ptr.vmem [resolvable:$true] %s23
      %29 = dma.hbm_to_vmem [thread:$0]  %s22, 2048, %s24, [#allocation8], 256, 256, 16
    $region17: #{tpu_custom_call.1} parent=1 // pred_fallthru
      _
    // Predicated region
    $region18: #{tpu_custom_call.1} parent=1 // pred_check
      _
    $region19: #{tpu_custom_call.1} parent=1 // pred_check_branch
      %31 = sbr.rel (0) target = $region21
    $region20: #{tpu_custom_call.1} parent=1 // pred_region
      %33 = dma.done [#allocation8], 2048
    $region21: #{tpu_custom_call.1} parent=1 // pred_fallthru
      _
    %p34 = scmp.eq.s32.totalorder 0, 0
    // Predicated region
    $region22: #{tpu_custom_call.1} parent=1 // pred_check
      %p35 = pneg %p34
    $region23: #{tpu_custom_call.1} parent=1 // pred_check_branch
      %37 = sbr.rel (%p35) target = $region25
    $region24: #{tpu_custom_call.1} parent=1 // pred_region
      %vm38 = vcmask 523264
      %39 = vst.msk [vmem:[#allocation2] sm:$0xff] %vm38, 0.0
      %vm40 = vcmask 261120
      %41 = vst.msk [vmem:[#allocation3] sm:$0xff] %vm40, 0.0
      %42 = vst.msk [vmem:[#allocation4] sm:$0xff] %vm40, 0.0
      %43 = vst.msk [vmem:[#allocation5] sm:$0xff] %vm40, -inf
      %44 = vst.msk [vmem:[#allocation6] sm:$0xff] %vm40, -inf
    $region25: #{tpu_custom_call.1} parent=1 // pred_fallthru
      _
    %v45 = vld [vmem:[#allocation7] sm:$0xff]
    %v46 = vld [vmem:[#allocation7 + $0x8] sm:$0xff]
    %v47 = vld [vmem:[#allocation7 + $0x10] sm:$0xff]
    %v48 = vld [vmem:[#allocation7 + $0x18] sm:$0xff]
    %v49 = vld [vmem:[#allocation7 + $0x20] sm:$0xff]
    %v50 = vld [vmem:[#allocation7 + $0x28] sm:$0xff]
    %v51 = vld [vmem:[#allocation7 + $0x30] sm:$0xff]
    %v52 = vld [vmem:[#allocation7 + $0x38] sm:$0xff]
    %v53 = vld [vmem:[#allocation7 + $0x40] sm:$0xff]
    %v54 = vld [vmem:[#allocation7 + $0x48] sm:$0xff]
    %v55 = vld [vmem:[#allocation7 + $0x50] sm:$0xff]
    %v56 = vld [vmem:[#allocation7 + $0x58] sm:$0xff]
    %v57 = vld [vmem:[#allocation7 + $0x60] sm:$0xff]
    %v58 = vld [vmem:[#allocation7 + $0x68] sm:$0xff]
    %v59 = vld [vmem:[#allocation7 + $0x70] sm:$0xff]
    %v60 = vld [vmem:[#allocation7 + $0x78] sm:$0xff]
    %v61 = vld [vmem:[%s0] sm:$0xff]
    %v62 = vld [vmem:[%s0 + $0x8] sm:$0xff]
    %v63 = vld [vmem:[#allocation2] sm:$0xff]
    %vm64 = vcmask 523264
    %v66 = vsel %vm64, %v63, 0
    %68 = vmatpush.msra.mxu0 0.0
    %69 = vmatpush.msra.mxu0 0.0
    %70 = vmatpush.msra.mxu0 0.0
    %71 = vmatpush.msra.mxu0 0.0
    %72 = vmatpush.msra.mxu0 0.0
    %73 = vmatpush.msra.mxu0 0.0
    %74 = vmatpush.msra.mxu0 0.0
    %75 = vmatpush.msra.mxu0 0.0
    %76 = vmatpush.msra.mxu0 %v59
    %77 = vmatpush.msra.mxu0 %v57
    %78 = vmatpush.msra.mxu0 %v55
    %79 = vmatpush.msra.mxu0 %v53
    %80 = vmatpush.msra.mxu0 %v51
    %81 = vmatpush.msra.mxu0 %v49
    %82 = vmatpush.msra.mxu0 %v47
    %83 = vmatpush.msra.mxu0 %v45
    %84 = vmatmul.f32.gmra.mxu0 %v66
    %v85 = vpop.f32.mrf.mxu0
    %v86 = vadd.f32 0.0, %v85
    %87 = vdwg.mxu0
    %88 = vmatpush.msra.mxu0 0.0
    %89 = vmatpush.msra.mxu0 0.0
    %90 = vmatpush.msra.mxu0 0.0
    %91 = vmatpush.msra.mxu0 0.0
    %92 = vmatpush.msra.mxu0 0.0
    %93 = vmatpush.msra.mxu0 0.0
    %94 = vmatpush.msra.mxu0 0.0
    %95 = vmatpush.msra.mxu0 0.0
    %96 = vmatpush.msra.mxu0 %v60
    %97 = vmatpush.msra.mxu0 %v58
    %98 = vmatpush.msra.mxu0 %v56
    %99 = vmatpush.msra.mxu0 %v54
    %100 = vmatpush.msra.mxu0 %v52
    %101 = vmatpush.msra.mxu0 %v50
    %102 = vmatpush.msra.mxu0 %v48
    %103 = vmatpush.msra.mxu0 %v46
    %104 = vmatmul.f32.gmra.mxu0 %v66
    %v105 = vpop.f32.mrf.mxu0
    %v106 = vadd.f32 0.0, %v105
    %107 = vdwg.mxu0
    %v108 = vadd.f32 %v61, %v86
    %v109 = vadd.f32 %v62, %v106
    %v110 = vxor.u32 %v108, 2147483648
    %v111 = vmul.f32 %v110, 1.442695
    %v112 = vpow.pop %v111
    %v113 = vadd.f32 %v112, 1.0
    %v114 = vrcp.pop %v113
    %v115 = vmul.f32 %v113, %v114
    %v116 = vsub.f32 1.0, %v115
    %v117 = vmul.f32 %v114, %v116
    %v118 = vadd.f32 %v114, %v117
    %vm119 = vweird.f32 %v113
    %vm120 = vweird.f32 %v114
    %vm121 = vmor %vm119, %vm120
    %v122 = vsel %vm121, %v114, %v118
    %v123 = vand.u32 2147483647, %v113
    %vm124 = vcmp.eq.f32.partialorder %v123, 8.507059e+37
    %v125 = vand.u32 %v113, 2147483648
    %v126 = vor.u32 1.1754944e-38, %v125
    %v127 = vsel %vm124, %v126, %v122
    %v128 = vmul.f32 1.0, %v127
    %v129 = vtanh.pop %v108
    %v130 = vxor.u32 %v109, 2147483648
    %v131 = vmul.f32 %v130, 1.442695
    %v132 = vpow.pop %v131
    %v133 = vadd.f32 %v132, 1.0
    %v134 = vrcp.pop %v133
    %v135 = vmul.f32 %v133, %v134
    %v136 = vsub.f32 1.0, %v135
    %v137 = vmul.f32 %v134, %v136
    %v138 = vadd.f32 %v134, %v137
    %vm139 = vweird.f32 %v133
    %vm140 = vweird.f32 %v134
    %vm141 = vmor %vm139, %vm140
    %v142 = vsel %vm141, %v134, %v138
    %v143 = vand.u32 2147483647, %v133
    %vm144 = vcmp.eq.f32.partialorder %v143, 8.507059e+37
    %v145 = vand.u32 %v133, 2147483648
    %v146 = vor.u32 1.1754944e-38, %v145
    %v147 = vsel %vm144, %v146, %v142
    %v148 = vmul.f32 1.0, %v147
    %v149 = vtanh.pop %v109
    %v150 = vld [vmem:[#allocation3] sm:$0xff]
    %152 = vrot.lane.b32.xlu0 %v150, 32
    %v153 = vpop.permute.xlu0 %152
    %v155 = vmul.f32 %v128, %v153
    %157 = vrot.lane.b32.xlu0 %v129, 64
    %v158 = vpop.permute.xlu0 %157
    %v160 = vmul.f32 %v128, %v158
    %162 = vrot.lane.b32.xlu0 %v160, 32
    %v163 = vpop.permute.xlu0 %162
    %v165 = vadd.f32 %v155, %v163
    %v166 = vld [vmem:[#allocation4] sm:$0xff]
    %168 = vrot.lane.b32.xlu0 %v166, 32
    %v169 = vpop.permute.xlu0 %168
    %v171 = vmul.f32 %v148, %v169
    %173 = vrot.lane.b32.xlu0 %v149, 64
    %v174 = vpop.permute.xlu0 %173
    %v176 = vmul.f32 %v148, %v174
    %178 = vrot.lane.b32.xlu0 %v176, 32
    %v179 = vpop.permute.xlu0 %178
    %v181 = vadd.f32 %v171, %v179
    %v182 = vtanh.pop %v165
    %184 = vrot.lane.b32.xlu0 %v182, 64
    %v185 = vpop.permute.xlu0 %184
    %v187 = vmul.f32 %v128, %v185
    %v188 = vtanh.pop %v181
    %190 = vrot.lane.b32.xlu0 %v188, 64
    %v191 = vpop.permute.xlu0 %190
    %v193 = vmul.f32 %v148, %v191
    %195 = vrot.lane.b32.xlu0 %v165, 96
    %v196 = vpop.permute.xlu0 %195
    %vm198 = vcmask 261120
    %199 = vst.msk [vmem:[#allocation3] sm:$0xff] %vm198, %v196
    %201 = vrot.lane.b32.xlu0 %v181, 96
    %v202 = vpop.permute.xlu0 %201
    %204 = vst.msk [vmem:[#allocation4] sm:$0xff] %vm198, %v202
    %206 = vrot.lane.b32.xlu0 %v187, 32
    %v207 = vpop.permute.xlu0 %206
    %210 = vrot.lane.b32.xlu0 %v193, 64
    %v211 = vpop.permute.xlu0 %210
    %v213 = vsel %vm198, %v207, %v211
    %214 = vst.msk [vmem:[#allocation2] sm:$0xff] %vm64, %v213
    %v215 = vld [vmem:[%s1] sm:$0xff]
    %v216 = vld [vmem:[%s2] sm:$0xff]
    %vm217 = vcmp.gt.f32.partialorder %v215, 0.0
    %v218 = vld [vmem:[#allocation5] sm:$0xff]
    %v219 = vmax.f32 %v218, %v207
    %v220 = vsel %vm217, 1, 0
    %221 = vset.pattern.permute.xlu0 0
    %222 = vperm.xlu0 %221, %v220
    %v223 = vpop.permute.xlu0 %222
    %vm224 = vcmp.eq.s32.totalorder %v223, 1
    %v225 = vsel %vm224, %v219, %v218
    %226 = vst.msk [vmem:[#allocation5] sm:$0xff] %vm198, %v225
    %vm227 = vcmp.gt.f32.partialorder %v216, 0.0
    %v228 = vld [vmem:[#allocation6] sm:$0xff]
    %229 = vrot.lane.b32.xlu0 %v193, 32
    %v230 = vpop.permute.xlu0 %229
    %v232 = vmax.f32 %v228, %v230
    %v233 = vsel %vm227, 1, 0
    %234 = vset.pattern.permute.xlu0 0
    %235 = vperm.xlu0 %234, %v233
    %v236 = vpop.permute.xlu0 %235
    %vm237 = vcmp.eq.s32.totalorder %v236, 1
    %v238 = vsel %vm237, %v232, %v228
    %239 = vst.msk [vmem:[#allocation6] sm:$0xff] %vm198, %v238
    %s240 = scalar_lea.vmem %s0, 16
    %v241 = vld [vmem:[%s240] sm:$0xff]
    %v242 = vld [vmem:[%s240 + $0x8] sm:$0xff]
    %v243 = vld [vmem:[#allocation2] sm:$0xff]
    %v245 = vsel %vm64, %v243, 0
    %247 = vmatpush.msra.mxu0 0.0
    %248 = vmatpush.msra.mxu0 0.0
    %249 = vmatpush.msra.mxu0 0.0
    %250 = vmatpush.msra.mxu0 0.0
    %251 = vmatpush.msra.mxu0 0.0
    %252 = vmatpush.msra.mxu0 0.0
    %253 = vmatpush.msra.mxu0 0.0
    %254 = vmatpush.msra.mxu0 0.0
    %255 = vmatpush.msra.mxu0 %v59
    %256 = vmatpush.msra.mxu0 %v57
    %257 = vmatpush.msra.mxu0 %v55
    %258 = vmatpush.msra.mxu0 %v53
    %259 = vmatpush.msra.mxu0 %v51
    %260 = vmatpush.msra.mxu0 %v49
    %261 = vmatpush.msra.mxu0 %v47
    %262 = vmatpush.msra.mxu0 %v45
    %263 = vmatmul.f32.gmra.mxu0 %v245
    %v264 = vpop.f32.mrf.mxu0
    %v265 = vadd.f32 0.0, %v264
    %266 = vdwg.mxu0
    %267 = vmatpush.msra.mxu0 0.0
    %268 = vmatpush.msra.mxu0 0.0
    %269 = vmatpush.msra.mxu0 0.0
    %270 = vmatpush.msra.mxu0 0.0
    %271 = vmatpush.msra.mxu0 0.0
    %272 = vmatpush.msra.mxu0 0.0
    %273 = vmatpush.msra.mxu0 0.0
    %274 = vmatpush.msra.mxu0 0.0
    %275 = vmatpush.msra.mxu0 %v60
    %276 = vmatpush.msra.mxu0 %v58
    %277 = vmatpush.msra.mxu0 %v56
    %278 = vmatpush.msra.mxu0 %v54
    %279 = vmatpush.msra.mxu0 %v52
    %280 = vmatpush.msra.mxu0 %v50
    %281 = vmatpush.msra.mxu0 %v48
    %282 = vmatpush.msra.mxu0 %v46
    %283 = vmatmul.f32.gmra.mxu0 %v245
    %v284 = vpop.f32.mrf.mxu0
    %v285 = vadd.f32 0.0, %v284
    %286 = vdwg.mxu0
    %v287 = vadd.f32 %v241, %v265
    %v288 = vadd.f32 %v242, %v285
    %v289 = vxor.u32 %v287, 2147483648
    %v290 = vmul.f32 %v289, 1.442695
    %v291 = vpow.pop %v290
    %v292 = vadd.f32 %v291, 1.0
    %v293 = vrcp.pop %v292
    %v294 = vmul.f32 %v292, %v293
    %v295 = vsub.f32 1.0, %v294
    %v296 = vmul.f32 %v293, %v295
    %v297 = vadd.f32 %v293, %v296
    %vm298 = vweird.f32 %v292
    %vm299 = vweird.f32 %v293
    %vm300 = vmor %vm298, %vm299
    %v301 = vsel %vm300, %v293, %v297
    %v302 = vand.u32 2147483647, %v292
    %vm303 = vcmp.eq.f32.partialorder %v302, 8.507059e+37
    %v304 = vand.u32 %v292, 2147483648
    %v305 = vor.u32 1.1754944e-38, %v304
    %v306 = vsel %vm303, %v305, %v301
    %v307 = vmul.f32 1.0, %v306
    %v308 = vtanh.pop %v287
    %v309 = vxor.u32 %v288, 2147483648
    %v310 = vmul.f32 %v309, 1.442695
    %v311 = vpow.pop %v310
    %v312 = vadd.f32 %v311, 1.0
    %v313 = vrcp.pop %v312
    %v314 = vmul.f32 %v312, %v313
    %v315 = vsub.f32 1.0, %v314
    %v316 = vmul.f32 %v313, %v315
    %v317 = vadd.f32 %v313, %v316
    %vm318 = vweird.f32 %v312
    %vm319 = vweird.f32 %v313
    %vm320 = vmor %vm318, %vm319
    %v321 = vsel %vm320, %v313, %v317
    %v322 = vand.u32 2147483647, %v312
    %vm323 = vcmp.eq.f32.partialorder %v322, 8.507059e+37
    %v324 = vand.u32 %v312, 2147483648
    %v325 = vor.u32 1.1754944e-38, %v324
    %v326 = vsel %vm323, %v325, %v321
    %v327 = vmul.f32 1.0, %v326
    %v328 = vtanh.pop %v288
    %v329 = vld [vmem:[#allocation3] sm:$0xff]
    %331 = vrot.lane.b32.xlu0 %v329, 32
    %v332 = vpop.permute.xlu0 %331
    %v334 = vmul.f32 %v307, %v332
    %336 = vrot.lane.b32.xlu0 %v308, 64
    %v337 = vpop.permute.xlu0 %336
    %v339 = vmul.f32 %v307, %v337
    %341 = vrot.lane.b32.xlu0 %v339, 32
    %v342 = vpop.permute.xlu0 %341
    %v344 = vadd.f32 %v334, %v342
    %v345 = vld [vmem:[#allocation4] sm:$0xff]
    %347 = vrot.lane.b32.xlu0 %v345, 32
    %v348 = vpop.permute.xlu0 %347
    %v350 = vmul.f32 %v327, %v348
    %352 = vrot.lane.b32.xlu0 %v328, 64
    %v353 = vpop.permute.xlu0 %352
    %v355 = vmul.f32 %v327, %v353
    %357 = vrot.lane.b32.xlu0 %v355, 32
    %v358 = vpop.permute.xlu0 %357
    %v360 = vadd.f32 %v350, %v358
    %v361 = vtanh.pop %v344
    %363 = vrot.lane.b32.xlu0 %v361, 64
    %v364 = vpop.permute.xlu0 %363
    %v366 = vmul.f32 %v307, %v364
    %v367 = vtanh.pop %v360
    %369 = vrot.lane.b32.xlu0 %v367, 64
    %v370 = vpop.permute.xlu0 %369
    %v372 = vmul.f32 %v327, %v370
    %374 = vrot.lane.b32.xlu0 %v344, 96
    %v375 = vpop.permute.xlu0 %374
    %377 = vst.msk [vmem:[#allocation3] sm:$0xff] %vm198, %v375
    %379 = vrot.lane.b32.xlu0 %v360, 96
    %v380 = vpop.permute.xlu0 %379
    %382 = vst.msk [vmem:[#allocation4] sm:$0xff] %vm198, %v380
    %384 = vrot.lane.b32.xlu0 %v366, 32
    %v385 = vpop.permute.xlu0 %384
    %388 = vrot.lane.b32.xlu0 %v372, 64
    %v389 = vpop.permute.xlu0 %388
    %v391 = vsel %vm198, %v385, %v389
    %392 = vst.msk [vmem:[#allocation2] sm:$0xff] %vm64, %v391
    %s393 = scalar_lea.vmem %s1, 8
    %v394 = vld [vmem:[%s393] sm:$0xff]
    %s395 = scalar_lea.vmem %s2, 8
    %v396 = vld [vmem:[%s395] sm:$0xff]
    %vm397 = vcmp.gt.f32.partialorder %v394, 0.0
    %v398 = vld [vmem:[#allocation5] sm:$0xff]
    %v399 = vmax.f32 %v398, %v385
    %v400 = vsel %vm397, 1, 0
    %401 = vset.pattern.permute.xlu0 0
    %402 = vperm.xlu0 %401, %v400
    %v403 = vpop.permute.xlu0 %402
    %vm404 = vcmp.eq.s32.totalorder %v403, 1
    %v405 = vsel %vm404, %v399, %v398
    %406 = vst.msk [vmem:[#allocation5] sm:$0xff] %vm198, %v405
    %vm407 = vcmp.gt.f32.partialorder %v396, 0.0
    %v408 = vld [vmem:[#allocation6] sm:$0xff]
    %409 = vrot.lane.b32.xlu0 %v372, 32
    %v410 = vpop.permute.xlu0 %409
    %v412 = vmax.f32 %v408, %v410
    %v413 = vsel %vm407, 1, 0
    %414 = vset.pattern.permute.xlu0 0
    %415 = vperm.xlu0 %414, %v413
    %v416 = vpop.permute.xlu0 %415
    %vm417 = vcmp.eq.s32.totalorder %v416, 1
    %v418 = vsel %vm417, %v412, %v408
    %419 = vst.msk [vmem:[#allocation6] sm:$0xff] %vm198, %v418
    %s420 = scalar_lea.vmem %s0, 32
    %v421 = vld [vmem:[%s420] sm:$0xff]
    %v422 = vld [vmem:[%s420 + $0x8] sm:$0xff]
    %v423 = vld [vmem:[#allocation2] sm:$0xff]
    %v425 = vsel %vm64, %v423, 0
    %427 = vmatpush.msra.mxu0 0.0
    %428 = vmatpush.msra.mxu0 0.0
    %429 = vmatpush.msra.mxu0 0.0
    %430 = vmatpush.msra.mxu0 0.0
    %431 = vmatpush.msra.mxu0 0.0
    %432 = vmatpush.msra.mxu0 0.0
    %433 = vmatpush.msra.mxu0 0.0
    %434 = vmatpush.msra.mxu0 0.0
    %435 = vmatpush.msra.mxu0 %v59
    %436 = vmatpush.msra.mxu0 %v57
    %437 = vmatpush.msra.mxu0 %v55
    %438 = vmatpush.msra.mxu0 %v53
    %439 = vmatpush.msra.mxu0 %v51
    %440 = vmatpush.msra.mxu0 %v49
    %441 = vmatpush.msra.mxu0 %v47
    %442 = vmatpush.msra.mxu0 %v45
    %443 = vmatmul.f32.gmra.mxu0 %v425
    %v444 = vpop.f32.mrf.mxu0
    %v445 = vadd.f32 0.0, %v444
    %446 = vdwg.mxu0
    %447 = vmatpush.msra.mxu0 0.0
    %448 = vmatpush.msra.mxu0 0.0
    %449 = vmatpush.msra.mxu0 0.0
    %450 = vmatpush.msra.mxu0 0.0
    %451 = vmatpush.msra.mxu0 0.0
    %452 = vmatpush.msra.mxu0 0.0
    %453 = vmatpush.msra.mxu0 0.0
    %454 = vmatpush.msra.mxu0 0.0
    %455 = vmatpush.msra.mxu0 %v60
    %456 = vmatpush.msra.mxu0 %v58
    %457 = vmatpush.msra.mxu0 %v56
    %458 = vmatpush.msra.mxu0 %v54
    %459 = vmatpush.msra.mxu0 %v52
    %460 = vmatpush.msra.mxu0 %v50
    %461 = vmatpush.msra.mxu0 %v48
    %462 = vmatpush.msra.mxu0 %v46
    %463 = vmatmul.f32.gmra.mxu0 %v425
    %v464 = vpop.f32.mrf.mxu0
    %v465 = vadd.f32 0.0, %v464
    %466 = vdwg.mxu0
    %v467 = vadd.f32 %v421, %v445
    %v468 = vadd.f32 %v422, %v465
    %v469 = vxor.u32 %v467, 2147483648
    %v470 = vmul.f32 %v469, 1.442695
    %v471 = vpow.pop %v470
    %v472 = vadd.f32 %v471, 1.0
    %v473 = vrcp.pop %v472
    %v474 = vmul.f32 %v472, %v473
    %v475 = vsub.f32 1.0, %v474
    %v476 = vmul.f32 %v473, %v475
    %v477 = vadd.f32 %v473, %v476
    %vm478 = vweird.f32 %v472
    %vm479 = vweird.f32 %v473
    %vm480 = vmor %vm478, %vm479
    %v481 = vsel %vm480, %v473, %v477
    %v482 = vand.u32 2147483647, %v472
    %vm483 = vcmp.eq.f32.partialorder %v482, 8.507059e+37
    %v484 = vand.u32 %v472, 2147483648
    %v485 = vor.u32 1.1754944e-38, %v484
    %v486 = vsel %vm483, %v485, %v481
    %v487 = vmul.f32 1.0, %v486
    %v488 = vtanh.pop %v467
    %v489 = vxor.u32 %v468, 2147483648
    %v490 = vmul.f32 %v489, 1.442695
    %v491 = vpow.pop %v490
    %v492 = vadd.f32 %v491, 1.0
    %v493 = vrcp.pop %v492
    %v494 = vmul.f32 %v492, %v493
    %v495 = vsub.f32 1.0, %v494
    %v496 = vmul.f32 %v493, %v495
    %v497 = vadd.f32 %v493, %v496
    %vm498 = vweird.f32 %v492
    %vm499 = vweird.f32 %v493
    %vm500 = vmor %vm498, %vm499
    %v501 = vsel %vm500, %v493, %v497
    %v502 = vand.u32 2147483647, %v492
    %vm503 = vcmp.eq.f32.partialorder %v502, 8.507059e+37
    %v504 = vand.u32 %v492, 2147483648
    %v505 = vor.u32 1.1754944e-38, %v504
    %v506 = vsel %vm503, %v505, %v501
    %v507 = vmul.f32 1.0, %v506
    %v508 = vtanh.pop %v468
    %v509 = vld [vmem:[#allocation3] sm:$0xff]
    %511 = vrot.lane.b32.xlu0 %v509, 32
    %v512 = vpop.permute.xlu0 %511
    %v514 = vmul.f32 %v487, %v512
    %516 = vrot.lane.b32.xlu0 %v488, 64
    %v517 = vpop.permute.xlu0 %516
    %v519 = vmul.f32 %v487, %v517
    %521 = vrot.lane.b32.xlu0 %v519, 32
    %v522 = vpop.permute.xlu0 %521
    %v524 = vadd.f32 %v514, %v522
    %v525 = vld [vmem:[#allocation4] sm:$0xff]
    %527 = vrot.lane.b32.xlu0 %v525, 32
    %v528 = vpop.permute.xlu0 %527
    %v530 = vmul.f32 %v507, %v528
    %532 = vrot.lane.b32.xlu0 %v508, 64
    %v533 = vpop.permute.xlu0 %532
    %v535 = vmul.f32 %v507, %v533
    %537 = vrot.lane.b32.xlu0 %v535, 32
    %v538 = vpop.permute.xlu0 %537
    %v540 = vadd.f32 %v530, %v538
    %v541 = vtanh.pop %v524
    %543 = vrot.lane.b32.xlu0 %v541, 64
    %v544 = vpop.permute.xlu0 %543
    %v546 = vmul.f32 %v487, %v544
    %v547 = vtanh.pop %v540
    %549 = vrot.lane.b32.xlu0 %v547, 64
    %v550 = vpop.permute.xlu0 %549
    %v552 = vmul.f32 %v507, %v550
    %554 = vrot.lane.b32.xlu0 %v524, 96
    %v555 = vpop.permute.xlu0 %554
    %557 = vst.msk [vmem:[#allocation3] sm:$0xff] %vm198, %v555
    %559 = vrot.lane.b32.xlu0 %v540, 96
    %v560 = vpop.permute.xlu0 %559
    %562 = vst.msk [vmem:[#allocation4] sm:$0xff] %vm198, %v560
    %564 = vrot.lane.b32.xlu0 %v546, 32
    %v565 = vpop.permute.xlu0 %564
    %568 = vrot.lane.b32.xlu0 %v552, 64
    %v569 = vpop.permute.xlu0 %568
    %v571 = vsel %vm198, %v565, %v569
    %572 = vst.msk [vmem:[#allocation2] sm:$0xff] %vm64, %v571
    %s573 = scalar_lea.vmem %s1, 16
    %v574 = vld [vmem:[%s573] sm:$0xff]
    %s575 = scalar_lea.vmem %s2, 16
    %v576 = vld [vmem:[%s575] sm:$0xff]
    %vm577 = vcmp.gt.f32.partialorder %v574, 0.0
    %v578 = vld [vmem:[#allocation5] sm:$0xff]
    %v579 = vmax.f32 %v578, %v565
    %v580 = vsel %vm577, 1, 0
    %581 = vset.pattern.permute.xlu0 0
    %582 = vperm.xlu0 %581, %v580
    %v583 = vpop.permute.xlu0 %582
    %vm584 = vcmp.eq.s32.totalorder %v583, 1
    %v585 = vsel %vm584, %v579, %v578
    %586 = vst.msk [vmem:[#allocation5] sm:$0xff] %vm198, %v585
    %vm587 = vcmp.gt.f32.partialorder %v576, 0.0
    %v588 = vld [vmem:[#allocation6] sm:$0xff]
    %589 = vrot.lane.b32.xlu0 %v552, 32
    %v590 = vpop.permute.xlu0 %589
    %v592 = vmax.f32 %v588, %v590
    %v593 = vsel %vm587, 1, 0
    %594 = vset.pattern.permute.xlu0 0
    %595 = vperm.xlu0 %594, %v593
    %v596 = vpop.permute.xlu0 %595
    %vm597 = vcmp.eq.s32.totalorder %v596, 1
    %v598 = vsel %vm597, %v592, %v588
    %599 = vst.msk [vmem:[#allocation6] sm:$0xff] %vm198, %v598
    %s600 = scalar_lea.vmem %s0, 48
    %v601 = vld [vmem:[%s600] sm:$0xff]
    %v602 = vld [vmem:[%s600 + $0x8] sm:$0xff]
    %v603 = vld [vmem:[#allocation2] sm:$0xff]
    %v605 = vsel %vm64, %v603, 0
    %607 = vmatpush.msra.mxu0 0.0
    %608 = vmatpush.msra.mxu0 0.0
    %609 = vmatpush.msra.mxu0 0.0
    %610 = vmatpush.msra.mxu0 0.0
    %611 = vmatpush.msra.mxu0 0.0
    %612 = vmatpush.msra.mxu0 0.0
    %613 = vmatpush.msra.mxu0 0.0
    %614 = vmatpush.msra.mxu0 0.0
    %615 = vmatpush.msra.mxu0 %v59
    %616 = vmatpush.msra.mxu0 %v57
    %617 = vmatpush.msra.mxu0 %v55
    %618 = vmatpush.msra.mxu0 %v53
    %619 = vmatpush.msra.mxu0 %v51
    %620 = vmatpush.msra.mxu0 %v49
    %621 = vmatpush.msra.mxu0 %v47
    %622 = vmatpush.msra.mxu0 %v45
    %623 = vmatmul.f32.gmra.mxu0 %v605
    %v624 = vpop.f32.mrf.mxu0
    %v625 = vadd.f32 0.0, %v624
    %626 = vdwg.mxu0
    %627 = vmatpush.msra.mxu0 0.0
    %628 = vmatpush.msra.mxu0 0.0
    %629 = vmatpush.msra.mxu0 0.0
    %630 = vmatpush.msra.mxu0 0.0
    %631 = vmatpush.msra.mxu0 0.0
    %632 = vmatpush.msra.mxu0 0.0
    %633 = vmatpush.msra.mxu0 0.0
    %634 = vmatpush.msra.mxu0 0.0
    %635 = vmatpush.msra.mxu0 %v60
    %636 = vmatpush.msra.mxu0 %v58
    %637 = vmatpush.msra.mxu0 %v56
    %638 = vmatpush.msra.mxu0 %v54
    %639 = vmatpush.msra.mxu0 %v52
    %640 = vmatpush.msra.mxu0 %v50
    %641 = vmatpush.msra.mxu0 %v48
    %642 = vmatpush.msra.mxu0 %v46
    %643 = vmatmul.f32.gmra.mxu0 %v605
    %v644 = vpop.f32.mrf.mxu0
    %v645 = vadd.f32 0.0, %v644
    %646 = vdwg.mxu0
    %v647 = vadd.f32 %v601, %v625
    %v648 = vadd.f32 %v602, %v645
    %v649 = vxor.u32 %v647, 2147483648
    %v650 = vmul.f32 %v649, 1.442695
    %v651 = vpow.pop %v650
    %v652 = vadd.f32 %v651, 1.0
    %v653 = vrcp.pop %v652
    %v654 = vmul.f32 %v652, %v653
    %v655 = vsub.f32 1.0, %v654
    %v656 = vmul.f32 %v653, %v655
    %v657 = vadd.f32 %v653, %v656
    %vm658 = vweird.f32 %v652
    %vm659 = vweird.f32 %v653
    %vm660 = vmor %vm658, %vm659
    %v661 = vsel %vm660, %v653, %v657
    %v662 = vand.u32 2147483647, %v652
    %vm663 = vcmp.eq.f32.partialorder %v662, 8.507059e+37
    %v664 = vand.u32 %v652, 2147483648
    %v665 = vor.u32 1.1754944e-38, %v664
    %v666 = vsel %vm663, %v665, %v661
    %v667 = vmul.f32 1.0, %v666
    %v668 = vtanh.pop %v647
    %v669 = vxor.u32 %v648, 2147483648
    %v670 = vmul.f32 %v669, 1.442695
    %v671 = vpow.pop %v670
    %v672 = vadd.f32 %v671, 1.0
    %v673 = vrcp.pop %v672
    %v674 = vmul.f32 %v672, %v673
    %v675 = vsub.f32 1.0, %v674
    %v676 = vmul.f32 %v673, %v675
    %v677 = vadd.f32 %v673, %v676
    %vm678 = vweird.f32 %v672
    %vm679 = vweird.f32 %v673
    %vm680 = vmor %vm678, %vm679
    %v681 = vsel %vm680, %v673, %v677
    %v682 = vand.u32 2147483647, %v672
    %vm683 = vcmp.eq.f32.partialorder %v682, 8.507059e+37
    %v684 = vand.u32 %v672, 2147483648
    %v685 = vor.u32 1.1754944e-38, %v684
    %v686 = vsel %vm683, %v685, %v681
    %v687 = vmul.f32 1.0, %v686
    %v688 = vtanh.pop %v648
    %v689 = vld [vmem:[#allocation3] sm:$0xff]
    %691 = vrot.lane.b32.xlu0 %v689, 32
    %v692 = vpop.permute.xlu0 %691
    %v694 = vmul.f32 %v667, %v692
    %696 = vrot.lane.b32.xlu0 %v668, 64
    %v697 = vpop.permute.xlu0 %696
    %v699 = vmul.f32 %v667, %v697
    %701 = vrot.lane.b32.xlu0 %v699, 32
    %v702 = vpop.permute.xlu0 %701
    %v704 = vadd.f32 %v694, %v702
    %v705 = vld [vmem:[#allocation4] sm:$0xff]
    %707 = vrot.lane.b32.xlu0 %v705, 32
    %v708 = vpop.permute.xlu0 %707
    %v710 = vmul.f32 %v687, %v708
    %712 = vrot.lane.b32.xlu0 %v688, 64
    %v713 = vpop.permute.xlu0 %712
    %v715 = vmul.f32 %v687, %v713
    %717 = vrot.lane.b32.xlu0 %v715, 32
    %v718 = vpop.permute.xlu0 %717
    %v720 = vadd.f32 %v710, %v718
    %v721 = vtanh.pop %v704
    %723 = vrot.lane.b32.xlu0 %v721, 64
    %v724 = vpop.permute.xlu0 %723
    %v726 = vmul.f32 %v667, %v724
    %v727 = vtanh.pop %v720
    %729 = vrot.lane.b32.xlu0 %v727, 64
    %v730 = vpop.permute.xlu0 %729
    %v732 = vmul.f32 %v687, %v730
    %734 = vrot.lane.b32.xlu0 %v704, 96
    %v735 = vpop.permute.xlu0 %734
    %737 = vst.msk [vmem:[#allocation3] sm:$0xff] %vm198, %v735
    %739 = vrot.lane.b32.xlu0 %v720, 96
    %v740 = vpop.permute.xlu0 %739
    %742 = vst.msk [vmem:[#allocation4] sm:$0xff] %vm198, %v740
    %744 = vrot.lane.b32.xlu0 %v726, 32
    %v745 = vpop.permute.xlu0 %744
    %748 = vrot.lane.b32.xlu0 %v732, 64
    %v749 = vpop.permute.xlu0 %748
    %v751 = vsel %vm198, %v745, %v749
    %752 = vst.msk [vmem:[#allocation2] sm:$0xff] %vm64, %v751
    %s753 = scalar_lea.vmem %s1, 24
    %v754 = vld [vmem:[%s753] sm:$0xff]
    %s755 = scalar_lea.vmem %s2, 24
    %v756 = vld [vmem:[%s755] sm:$0xff]
    %vm757 = vcmp.gt.f32.partialorder %v754, 0.0
    %v758 = vld [vmem:[#allocation5] sm:$0xff]
    %v759 = vmax.f32 %v758, %v745
    %v760 = vsel %vm757, 1, 0
    %761 = vset.pattern.permute.xlu0 0
    %762 = vperm.xlu0 %761, %v760
    %v763 = vpop.permute.xlu0 %762
    %vm764 = vcmp.eq.s32.totalorder %v763, 1
    %v765 = vsel %vm764, %v759, %v758
    %766 = vst.msk [vmem:[#allocation5] sm:$0xff] %vm198, %v765
    %vm767 = vcmp.gt.f32.partialorder %v756, 0.0
    %v768 = vld [vmem:[#allocation6] sm:$0xff]
    %769 = vrot.lane.b32.xlu0 %v732, 32
    %v770 = vpop.permute.xlu0 %769
    %v772 = vmax.f32 %v768, %v770
    %v773 = vsel %vm767, 1, 0
    %774 = vset.pattern.permute.xlu0 0
    %775 = vperm.xlu0 %774, %v773
    %v776 = vpop.permute.xlu0 %775
    %vm777 = vcmp.eq.s32.totalorder %v776, 1
    %v778 = vsel %vm777, %v772, %v768
    %779 = vst.msk [vmem:[#allocation6] sm:$0xff] %vm198, %v778
    %s780 = scalar_lea.vmem %s0, 64
    %v781 = vld [vmem:[%s780] sm:$0xff]
    %v782 = vld [vmem:[%s780 + $0x8] sm:$0xff]
    %v783 = vld [vmem:[#allocation2] sm:$0xff]
    %v785 = vsel %vm64, %v783, 0
    %787 = vmatpush.msra.mxu0 0.0
    %788 = vmatpush.msra.mxu0 0.0
    %789 = vmatpush.msra.mxu0 0.0
    %790 = vmatpush.msra.mxu0 0.0
    %791 = vmatpush.msra.mxu0 0.0
    %792 = vmatpush.msra.mxu0 0.0
    %793 = vmatpush.msra.mxu0 0.0
    %794 = vmatpush.msra.mxu0 0.0
    %795 = vmatpush.msra.mxu0 %v59
    %796 = vmatpush.msra.mxu0 %v57
    %797 = vmatpush.msra.mxu0 %v55
    %798 = vmatpush.msra.mxu0 %v53
    %799 = vmatpush.msra.mxu0 %v51
    %800 = vmatpush.msra.mxu0 %v49
    %801 = vmatpush.msra.mxu0 %v47
    %802 = vmatpush.msra.mxu0 %v45
    %803 = vmatmul.f32.gmra.mxu0 %v785
    %v804 = vpop.f32.mrf.mxu0
    %v805 = vadd.f32 0.0, %v804
    %806 = vdwg.mxu0
    %807 = vmatpush.msra.mxu0 0.0
    %808 = vmatpush.msra.mxu0 0.0
    %809 = vmatpush.msra.mxu0 0.0
    %810 = vmatpush.msra.mxu0 0.0
    %811 = vmatpush.msra.mxu0 0.0
    %812 = vmatpush.msra.mxu0 0.0
    %813 = vmatpush.msra.mxu0 0.0
    %814 = vmatpush.msra.mxu0 0.0
    %815 = vmatpush.msra.mxu0 %v60
    %816 = vmatpush.msra.mxu0 %v58
    %817 = vmatpush.msra.mxu0 %v56
    %818 = vmatpush.msra.mxu0 %v54
    %819 = vmatpush.msra.mxu0 %v52
    %820 = vmatpush.msra.mxu0 %v50
    %821 = vmatpush.msra.mxu0 %v48
    %822 = vmatpush.msra.mxu0 %v46
    %823 = vmatmul.f32.gmra.mxu0 %v785
    %v824 = vpop.f32.mrf.mxu0
    %v825 = vadd.f32 0.0, %v824
    %826 = vdwg.mxu0
    %v827 = vadd.f32 %v781, %v805
    %v828 = vadd.f32 %v782, %v825
    %v829 = vxor.u32 %v827, 2147483648
    %v830 = vmul.f32 %v829, 1.442695
    %v831 = vpow.pop %v830
    %v832 = vadd.f32 %v831, 1.0
    %v833 = vrcp.pop %v832
    %v834 = vmul.f32 %v832, %v833
    %v835 = vsub.f32 1.0, %v834
    %v836 = vmul.f32 %v833, %v835
    %v837 = vadd.f32 %v833, %v836
    %vm838 = vweird.f32 %v832
    %vm839 = vweird.f32 %v833
    %vm840 = vmor %vm838, %vm839
    %v841 = vsel %vm840, %v833, %v837
    %v842 = vand.u32 2147483647, %v832
    %vm843 = vcmp.eq.f32.partialorder %v842, 8.507059e+37
    %v844 = vand.u32 %v832, 2147483648
    %v845 = vor.u32 1.1754944e-38, %v844
    %v846 = vsel %vm843, %v845, %v841
    %v847 = vmul.f32 1.0, %v846
    %v848 = vtanh.pop %v827
    %v849 = vxor.u32 %v828, 2147483648
    %v850 = vmul.f32 %v849, 1.442695
    %v851 = vpow.pop %v850
    %v852 = vadd.f32 %v851, 1.0
    %v853 = vrcp.pop %v852
    %v854 = vmul.f32 %v852, %v853
    %v855 = vsub.f32 1.0, %v854
    %v856 = vmul.f32 %v853, %v855
    %v857 = vadd.f32 %v853, %v856
    %vm858 = vweird.f32 %v852
    %vm859 = vweird.f32 %v853
    %vm860 = vmor %vm858, %vm859
    %v861 = vsel %vm860, %v853, %v857
    %v862 = vand.u32 2147483647, %v852
    %vm863 = vcmp.eq.f32.partialorder %v862, 8.507059e+37
    %v864 = vand.u32 %v852, 2147483648
    %v865 = vor.u32 1.1754944e-38, %v864
    %v866 = vsel %vm863, %v865, %v861
    %v867 = vmul.f32 1.0, %v866
    %v868 = vtanh.pop %v828
    %v869 = vld [vmem:[#allocation3] sm:$0xff]
    %871 = vrot.lane.b32.xlu0 %v869, 32
    %v872 = vpop.permute.xlu0 %871
    %v874 = vmul.f32 %v847, %v872
    %876 = vrot.lane.b32.xlu0 %v848, 64
    %v877 = vpop.permute.xlu0 %876
    %v879 = vmul.f32 %v847, %v877
    %881 = vrot.lane.b32.xlu0 %v879, 32
    %v882 = vpop.permute.xlu0 %881
    %v884 = vadd.f32 %v874, %v882
    %v885 = vld [vmem:[#allocation4] sm:$0xff]
    %887 = vrot.lane.b32.xlu0 %v885, 32
    %v888 = vpop.permute.xlu0 %887
    %v890 = vmul.f32 %v867, %v888
    %892 = vrot.lane.b32.xlu0 %v868, 64
    %v893 = vpop.permute.xlu0 %892
    %v895 = vmul.f32 %v867, %v893
    %897 = vrot.lane.b32.xlu0 %v895, 32
    %v898 = vpop.permute.xlu0 %897
    %v900 = vadd.f32 %v890, %v898
    %v901 = vtanh.pop %v884
    %903 = vrot.lane.b32.xlu0 %v901, 64
    %v904 = vpop.permute.xlu0 %903
    %v906 = vmul.f32 %v847, %v904
    %v907 = vtanh.pop %v900
    %909 = vrot.lane.b32.xlu0 %v907, 64
    %v910 = vpop.permute.xlu0 %909
    %v912 = vmul.f32 %v867, %v910
    %914 = vrot.lane.b32.xlu0 %v884, 96
    %v915 = vpop.permute.xlu0 %914
    %917 = vst.msk [vmem:[#allocation3] sm:$0xff] %vm198, %v915
    %919 = vrot.lane.b32.xlu0 %v900, 96
    %v920 = vpop.permute.xlu0 %919
    %922 = vst.msk [vmem:[#allocation4] sm:$0xff] %vm198, %v920
    %924 = vrot.lane.b32.xlu0 %v906, 32
    %v925 = vpop.permute.xlu0 %924
    %928 = vrot.lane.b32.xlu0 %v912, 64
    %v929 = vpop.permute.xlu0 %928
    %v931 = vsel %vm198, %v925, %v929
    %932 = vst.msk [vmem:[#allocation2] sm:$0xff] %vm64, %v931
    %s933 = scalar_lea.vmem %s1, 32
    %v934 = vld [vmem:[%s933] sm:$0xff]
    %s935 = scalar_lea.vmem %s2, 32
    %v936 = vld [vmem:[%s935] sm:$0xff]
    %vm937 = vcmp.gt.f32.partialorder %v934, 0.0
    %v938 = vld [vmem:[#allocation5] sm:$0xff]
    %v939 = vmax.f32 %v938, %v925
    %v940 = vsel %vm937, 1, 0
    %941 = vset.pattern.permute.xlu0 0
    %942 = vperm.xlu0 %941, %v940
    %v943 = vpop.permute.xlu0 %942
    %vm944 = vcmp.eq.s32.totalorder %v943, 1
    %v945 = vsel %vm944, %v939, %v938
    %946 = vst.msk [vmem:[#allocation5] sm:$0xff] %vm198, %v945
    %vm947 = vcmp.gt.f32.partialorder %v936, 0.0
    %v948 = vld [vmem:[#allocation6] sm:$0xff]
    %949 = vrot.lane.b32.xlu0 %v912, 32
    %v950 = vpop.permute.xlu0 %949
    %v952 = vmax.f32 %v948, %v950
    %v953 = vsel %vm947, 1, 0
    %954 = vset.pattern.permute.xlu0 0
    %955 = vperm.xlu0 %954, %v953
    %v956 = vpop.permute.xlu0 %955
    %vm957 = vcmp.eq.s32.totalorder %v956, 1
    %v958 = vsel %vm957, %v952, %v948
    %959 = vst.msk [vmem:[#allocation6] sm:$0xff] %vm198, %v958
    %s960 = scalar_lea.vmem %s0, 80
    %v961 = vld [vmem:[%s960] sm:$0xff]
    %v962 = vld [vmem:[%s960 + $0x8] sm:$0xff]
    %v963 = vld [vmem:[#allocation2] sm:$0xff]
    %v965 = vsel %vm64, %v963, 0
    %967 = vmatpush.msra.mxu0 0.0
    %968 = vmatpush.msra.mxu0 0.0
    %969 = vmatpush.msra.mxu0 0.0
    %970 = vmatpush.msra.mxu0 0.0
    %971 = vmatpush.msra.mxu0 0.0
    %972 = vmatpush.msra.mxu0 0.0
    %973 = vmatpush.msra.mxu0 0.0
    %974 = vmatpush.msra.mxu0 0.0
    %975 = vmatpush.msra.mxu0 %v59
    %976 = vmatpush.msra.mxu0 %v57
    %977 = vmatpush.msra.mxu0 %v55
    %978 = vmatpush.msra.mxu0 %v53
    %979 = vmatpush.msra.mxu0 %v51
    %980 = vmatpush.msra.mxu0 %v49
    %981 = vmatpush.msra.mxu0 %v47
    %982 = vmatpush.msra.mxu0 %v45
    %983 = vmatmul.f32.gmra.mxu0 %v965
    %v984 = vpop.f32.mrf.mxu0
    %v985 = vadd.f32 0.0, %v984
    %986 = vdwg.mxu0
    %987 = vmatpush.msra.mxu0 0.0
    %988 = vmatpush.msra.mxu0 0.0
    %989 = vmatpush.msra.mxu0 0.0
    %990 = vmatpush.msra.mxu0 0.0
    %991 = vmatpush.msra.mxu0 0.0
    %992 = vmatpush.msra.mxu0 0.0
    %993 = vmatpush.msra.mxu0 0.0
    %994 = vmatpush.msra.mxu0 0.0
    %995 = vmatpush.msra.mxu0 %v60
    %996 = vmatpush.msra.mxu0 %v58
    %997 = vmatpush.msra.mxu0 %v56
    %998 = vmatpush.msra.mxu0 %v54
    %999 = vmatpush.msra.mxu0 %v52
    %1000 = vmatpush.msra.mxu0 %v50
    %1001 = vmatpush.msra.mxu0 %v48
    %1002 = vmatpush.msra.mxu0 %v46
    %1003 = vmatmul.f32.gmra.mxu0 %v965
    %v1004 = vpop.f32.mrf.mxu0
    %v1005 = vadd.f32 0.0, %v1004
    %1006 = vdwg.mxu0
    %v1007 = vadd.f32 %v961, %v985
    %v1008 = vadd.f32 %v962, %v1005
    %v1009 = vxor.u32 %v1007, 2147483648
    %v1010 = vmul.f32 %v1009, 1.442695
    %v1011 = vpow.pop %v1010
    %v1012 = vadd.f32 %v1011, 1.0
    %v1013 = vrcp.pop %v1012
    %v1014 = vmul.f32 %v1012, %v1013
    %v1015 = vsub.f32 1.0, %v1014
    %v1016 = vmul.f32 %v1013, %v1015
    %v1017 = vadd.f32 %v1013, %v1016
    %vm1018 = vweird.f32 %v1012
    %vm1019 = vweird.f32 %v1013
    %vm1020 = vmor %vm1018, %vm1019
    %v1021 = vsel %vm1020, %v1013, %v1017
    %v1022 = vand.u32 2147483647, %v1012
    %vm1023 = vcmp.eq.f32.partialorder %v1022, 8.507059e+37
    %v1024 = vand.u32 %v1012, 2147483648
    %v1025 = vor.u32 1.1754944e-38, %v1024
    %v1026 = vsel %vm1023, %v1025, %v1021
    %v1027 = vmul.f32 1.0, %v1026
    %v1028 = vtanh.pop %v1007
    %v1029 = vxor.u32 %v1008, 2147483648
    %v1030 = vmul.f32 %v1029, 1.442695
    %v1031 = vpow.pop %v1030
    %v1032 = vadd.f32 %v1031, 1.0
    %v1033 = vrcp.pop %v1032
    %v1034 = vmul.f32 %v1032, %v1033
    %v1035 = vsub.f32 1.0, %v1034
    %v1036 = vmul.f32 %v1033, %v1035
    %v1037 = vadd.f32 %v1033, %v1036
    %vm1038 = vweird.f32 %v1032
    %vm1039 = vweird.f32 %v1033
    %vm1040 = vmor %vm1038, %vm1039
    %v1041 = vsel %vm1040, %v1033, %v1037
    %v1042 = vand.u32 2147483647, %v1032
    %vm1043 = vcmp.eq.f32.partialorder %v1042, 8.507059e+37
    %v1044 = vand.u32 %v1032, 2147483648
    %v1045 = vor.u32 1.1754944e-38, %v1044
    %v1046 = vsel %vm1043, %v1045, %v1041
    %v1047 = vmul.f32 1.0, %v1046
    %v1048 = vtanh.pop %v1008
    %v1049 = vld [vmem:[#allocation3] sm:$0xff]
    %1051 = vrot.lane.b32.xlu0 %v1049, 32
    %v1052 = vpop.permute.xlu0 %1051
    %v1054 = vmul.f32 %v1027, %v1052
    %1056 = vrot.lane.b32.xlu0 %v1028, 64
    %v1057 = vpop.permute.xlu0 %1056
    %v1059 = vmul.f32 %v1027, %v1057
    %1061 = vrot.lane.b32.xlu0 %v1059, 32
    %v1062 = vpop.permute.xlu0 %1061
    %v1064 = vadd.f32 %v1054, %v1062
    %v1065 = vld [vmem:[#allocation4] sm:$0xff]
    %1067 = vrot.lane.b32.xlu0 %v1065, 32
    %v1068 = vpop.permute.xlu0 %1067
    %v1070 = vmul.f32 %v1047, %v1068
    %1072 = vrot.lane.b32.xlu0 %v1048, 64
    %v1073 = vpop.permute.xlu0 %1072
    %v1075 = vmul.f32 %v1047, %v1073
    %1077 = vrot.lane.b32.xlu0 %v1075, 32
    %v1078 = vpop.permute.xlu0 %1077
    %v1080 = vadd.f32 %v1070, %v1078
    %v1081 = vtanh.pop %v1064
    %1083 = vrot.lane.b32.xlu0 %v1081, 64
    %v1084 = vpop.permute.xlu0 %1083
    %v1086 = vmul.f32 %v1027, %v1084
    %v1087 = vtanh.pop %v1080
    %1089 = vrot.lane.b32.xlu0 %v1087, 64
    %v1090 = vpop.permute.xlu0 %1089
    %v1092 = vmul.f32 %v1047, %v1090
    %1094 = vrot.lane.b32.xlu0 %v1064, 96
    %v1095 = vpop.permute.xlu0 %1094
    %1097 = vst.msk [vmem:[#allocation3] sm:$0xff] %vm198, %v1095
    %1099 = vrot.lane.b32.xlu0 %v1080, 96
    %v1100 = vpop.permute.xlu0 %1099
    %1102 = vst.msk [vmem:[#allocation4] sm:$0xff] %vm198, %v1100
    %1104 = vrot.lane.b32.xlu0 %v1086, 32
    %v1105 = vpop.permute.xlu0 %1104
    %1108 = vrot.lane.b32.xlu0 %v1092, 64
    %v1109 = vpop.permute.xlu0 %1108
    %v1111 = vsel %vm198, %v1105, %v1109
    %1112 = vst.msk [vmem:[#allocation2] sm:$0xff] %vm64, %v1111
    %s1113 = scalar_lea.vmem %s1, 40
    %v1114 = vld [vmem:[%s1113] sm:$0xff]
    %s1115 = scalar_lea.vmem %s2, 40
    %v1116 = vld [vmem:[%s1115] sm:$0xff]
    %vm1117 = vcmp.gt.f32.partialorder %v1114, 0.0
    %v1118 = vld [vmem:[#allocation5] sm:$0xff]
    %v1119 = vmax.f32 %v1118, %v1105
    %v1120 = vsel %vm1117, 1, 0
    %1121 = vset.pattern.permute.xlu0 0
    %1122 = vperm.xlu0 %1121, %v1120
    %v1123 = vpop.permute.xlu0 %1122
    %vm1124 = vcmp.eq.s32.totalorder %v1123, 1
    %v1125 = vsel %vm1124, %v1119, %v1118
    %1126 = vst.msk [vmem:[#allocation5] sm:$0xff] %vm198, %v1125
    %vm1127 = vcmp.gt.f32.partialorder %v1116, 0.0
    %v1128 = vld [vmem:[#allocation6] sm:$0xff]
    %1129 = vrot.lane.b32.xlu0 %v1092, 32
    %v1130 = vpop.permute.xlu0 %1129
    %v1132 = vmax.f32 %v1128, %v1130
    %v1133 = vsel %vm1127, 1, 0
    %1134 = vset.pattern.permute.xlu0 0
    %1135 = vperm.xlu0 %1134, %v1133
    %v1136 = vpop.permute.xlu0 %1135
    %vm1137 = vcmp.eq.s32.totalorder %v1136, 1
    %v1138 = vsel %vm1137, %v1132, %v1128
    %1139 = vst.msk [vmem:[#allocation6] sm:$0xff] %vm198, %v1138
    %s1140 = scalar_lea.vmem %s0, 96
    %v1141 = vld [vmem:[%s1140] sm:$0xff]
    %v1142 = vld [vmem:[%s1140 + $0x8] sm:$0xff]
    %v1143 = vld [vmem:[#allocation2] sm:$0xff]
    %v1145 = vsel %vm64, %v1143, 0
    %1147 = vmatpush.msra.mxu0 0.0
    %1148 = vmatpush.msra.mxu0 0.0
    %1149 = vmatpush.msra.mxu0 0.0
    %1150 = vmatpush.msra.mxu0 0.0
    %1151 = vmatpush.msra.mxu0 0.0
    %1152 = vmatpush.msra.mxu0 0.0
    %1153 = vmatpush.msra.mxu0 0.0
    %1154 = vmatpush.msra.mxu0 0.0
    %1155 = vmatpush.msra.mxu0 %v59
    %1156 = vmatpush.msra.mxu0 %v57
    %1157 = vmatpush.msra.mxu0 %v55
    %1158 = vmatpush.msra.mxu0 %v53
    %1159 = vmatpush.msra.mxu0 %v51
    %1160 = vmatpush.msra.mxu0 %v49
    %1161 = vmatpush.msra.mxu0 %v47
    %1162 = vmatpush.msra.mxu0 %v45
    %1163 = vmatmul.f32.gmra.mxu0 %v1145
    %v1164 = vpop.f32.mrf.mxu0
    %v1165 = vadd.f32 0.0, %v1164
    %1166 = vdwg.mxu0
    %1167 = vmatpush.msra.mxu0 0.0
    %1168 = vmatpush.msra.mxu0 0.0
    %1169 = vmatpush.msra.mxu0 0.0
    %1170 = vmatpush.msra.mxu0 0.0
    %1171 = vmatpush.msra.mxu0 0.0
    %1172 = vmatpush.msra.mxu0 0.0
    %1173 = vmatpush.msra.mxu0 0.0
    %1174 = vmatpush.msra.mxu0 0.0
    %1175 = vmatpush.msra.mxu0 %v60
    %1176 = vmatpush.msra.mxu0 %v58
    %1177 = vmatpush.msra.mxu0 %v56
    %1178 = vmatpush.msra.mxu0 %v54
    %1179 = vmatpush.msra.mxu0 %v52
    %1180 = vmatpush.msra.mxu0 %v50
    %1181 = vmatpush.msra.mxu0 %v48
    %1182 = vmatpush.msra.mxu0 %v46
    %1183 = vmatmul.f32.gmra.mxu0 %v1145
    %v1184 = vpop.f32.mrf.mxu0
    %v1185 = vadd.f32 0.0, %v1184
    %1186 = vdwg.mxu0
    %v1187 = vadd.f32 %v1141, %v1165
    %v1188 = vadd.f32 %v1142, %v1185
    %v1189 = vxor.u32 %v1187, 2147483648
    %v1190 = vmul.f32 %v1189, 1.442695
    %v1191 = vpow.pop %v1190
    %v1192 = vadd.f32 %v1191, 1.0
    %v1193 = vrcp.pop %v1192
    %v1194 = vmul.f32 %v1192, %v1193
    %v1195 = vsub.f32 1.0, %v1194
    %v1196 = vmul.f32 %v1193, %v1195
    %v1197 = vadd.f32 %v1193, %v1196
    %vm1198 = vweird.f32 %v1192
    %vm1199 = vweird.f32 %v1193
    %vm1200 = vmor %vm1198, %vm1199
    %v1201 = vsel %vm1200, %v1193, %v1197
    %v1202 = vand.u32 2147483647, %v1192
    %vm1203 = vcmp.eq.f32.partialorder %v1202, 8.507059e+37
    %v1204 = vand.u32 %v1192, 2147483648
    %v1205 = vor.u32 1.1754944e-38, %v1204
    %v1206 = vsel %vm1203, %v1205, %v1201
    %v1207 = vmul.f32 1.0, %v1206
    %v1208 = vtanh.pop %v1187
    %v1209 = vxor.u32 %v1188, 2147483648
    %v1210 = vmul.f32 %v1209, 1.442695
    %v1211 = vpow.pop %v1210
    %v1212 = vadd.f32 %v1211, 1.0
    %v1213 = vrcp.pop %v1212
    %v1214 = vmul.f32 %v1212, %v1213
    %v1215 = vsub.f32 1.0, %v1214
    %v1216 = vmul.f32 %v1213, %v1215
    %v1217 = vadd.f32 %v1213, %v1216
    %vm1218 = vweird.f32 %v1212
    %vm1219 = vweird.f32 %v1213
    %vm1220 = vmor %vm1218, %vm1219
    %v1221 = vsel %vm1220, %v1213, %v1217
    %v1222 = vand.u32 2147483647, %v1212
    %vm1223 = vcmp.eq.f32.partialorder %v1222, 8.507059e+37
    %v1224 = vand.u32 %v1212, 2147483648
    %v1225 = vor.u32 1.1754944e-38, %v1224
    %v1226 = vsel %vm1223, %v1225, %v1221
    %v1227 = vmul.f32 1.0, %v1226
    %v1228 = vtanh.pop %v1188
    %v1229 = vld [vmem:[#allocation3] sm:$0xff]
    %1231 = vrot.lane.b32.xlu0 %v1229, 32
    %v1232 = vpop.permute.xlu0 %1231
    %v1234 = vmul.f32 %v1207, %v1232
    %1236 = vrot.lane.b32.xlu0 %v1208, 64
    %v1237 = vpop.permute.xlu0 %1236
    %v1239 = vmul.f32 %v1207, %v1237
    %1241 = vrot.lane.b32.xlu0 %v1239, 32
    %v1242 = vpop.permute.xlu0 %1241
    %v1244 = vadd.f32 %v1234, %v1242
    %v1245 = vld [vmem:[#allocation4] sm:$0xff]
    %1247 = vrot.lane.b32.xlu0 %v1245, 32
    %v1248 = vpop.permute.xlu0 %1247
    %v1250 = vmul.f32 %v1227, %v1248
    %1252 = vrot.lane.b32.xlu0 %v1228, 64
    %v1253 = vpop.permute.xlu0 %1252
    %v1255 = vmul.f32 %v1227, %v1253
    %1257 = vrot.lane.b32.xlu0 %v1255, 32
    %v1258 = vpop.permute.xlu0 %1257
    %v1260 = vadd.f32 %v1250, %v1258
    %v1261 = vtanh.pop %v1244
    %1263 = vrot.lane.b32.xlu0 %v1261, 64
    %v1264 = vpop.permute.xlu0 %1263
    %v1266 = vmul.f32 %v1207, %v1264
    %v1267 = vtanh.pop %v1260
    %1269 = vrot.lane.b32.xlu0 %v1267, 64
    %v1270 = vpop.permute.xlu0 %1269
    %v1272 = vmul.f32 %v1227, %v1270
    %1274 = vrot.lane.b32.xlu0 %v1244, 96
    %v1275 = vpop.permute.xlu0 %1274
    %1277 = vst.msk [vmem:[#allocation3] sm:$0xff] %vm198, %v1275
    %1279 = vrot.lane.b32.xlu0 %v1260, 96
    %v1280 = vpop.permute.xlu0 %1279
    %1282 = vst.msk [vmem:[#allocation4] sm:$0xff] %vm198, %v1280
    %1284 = vrot.lane.b32.xlu0 %v1266, 32
    %v1285 = vpop.permute.xlu0 %1284
    %1288 = vrot.lane.b32.xlu0 %v1272, 64
    %v1289 = vpop.permute.xlu0 %1288
    %v1291 = vsel %vm198, %v1285, %v1289
    %1292 = vst.msk [vmem:[#allocation2] sm:$0xff] %vm64, %v1291
    %s1293 = scalar_lea.vmem %s1, 48
    %v1294 = vld [vmem:[%s1293] sm:$0xff]
    %s1295 = scalar_lea.vmem %s2, 48
    %v1296 = vld [vmem:[%s1295] sm:$0xff]
    %vm1297 = vcmp.gt.f32.partialorder %v1294, 0.0
    %v1298 = vld [vmem:[#allocation5] sm:$0xff]
    %v1299 = vmax.f32 %v1298, %v1285
    %v1300 = vsel %vm1297, 1, 0
    %1301 = vset.pattern.permute.xlu0 0
    %1302 = vperm.xlu0 %1301, %v1300
    %v1303 = vpop.permute.xlu0 %1302
    %vm1304 = vcmp.eq.s32.totalorder %v1303, 1
    %v1305 = vsel %vm1304, %v1299, %v1298
    %1306 = vst.msk [vmem:[#allocation5] sm:$0xff] %vm198, %v1305
    %vm1307 = vcmp.gt.f32.partialorder %v1296, 0.0
    %v1308 = vld [vmem:[#allocation6] sm:$0xff]
    %1309 = vrot.lane.b32.xlu0 %v1272, 32
    %v1310 = vpop.permute.xlu0 %1309
    %v1312 = vmax.f32 %v1308, %v1310
    %v1313 = vsel %vm1307, 1, 0
    %1314 = vset.pattern.permute.xlu0 0
    %1315 = vperm.xlu0 %1314, %v1313
    %v1316 = vpop.permute.xlu0 %1315
    %vm1317 = vcmp.eq.s32.totalorder %v1316, 1
    %v1318 = vsel %vm1317, %v1312, %v1308
    %1319 = vst.msk [vmem:[#allocation6] sm:$0xff] %vm198, %v1318
    %s1320 = scalar_lea.vmem %s0, 112
    %v1321 = vld [vmem:[%s1320] sm:$0xff]
    %v1322 = vld [vmem:[%s1320 + $0x8] sm:$0xff]
    %v1323 = vld [vmem:[#allocation2] sm:$0xff]
    %v1325 = vsel %vm64, %v1323, 0
    %1327 = vmatpush.msra.mxu0 0.0
    %1328 = vmatpush.msra.mxu0 0.0
    %1329 = vmatpush.msra.mxu0 0.0
    %1330 = vmatpush.msra.mxu0 0.0
    %1331 = vmatpush.msra.mxu0 0.0
    %1332 = vmatpush.msra.mxu0 0.0
    %1333 = vmatpush.msra.mxu0 0.0
    %1334 = vmatpush.msra.mxu0 0.0
    %1335 = vmatpush.msra.mxu0 %v59
    %1336 = vmatpush.msra.mxu0 %v57
    %1337 = vmatpush.msra.mxu0 %v55
    %1338 = vmatpush.msra.mxu0 %v53
    %1339 = vmatpush.msra.mxu0 %v51
    %1340 = vmatpush.msra.mxu0 %v49
    %1341 = vmatpush.msra.mxu0 %v47
    %1342 = vmatpush.msra.mxu0 %v45
    %1343 = vmatmul.f32.gmra.mxu0 %v1325
    %v1344 = vpop.f32.mrf.mxu0
    %v1345 = vadd.f32 0.0, %v1344
    %1346 = vdwg.mxu0
    %1347 = vmatpush.msra.mxu0 0.0
    %1348 = vmatpush.msra.mxu0 0.0
    %1349 = vmatpush.msra.mxu0 0.0
    %1350 = vmatpush.msra.mxu0 0.0
    %1351 = vmatpush.msra.mxu0 0.0
    %1352 = vmatpush.msra.mxu0 0.0
    %1353 = vmatpush.msra.mxu0 0.0
    %1354 = vmatpush.msra.mxu0 0.0
    %1355 = vmatpush.msra.mxu0 %v60
    %1356 = vmatpush.msra.mxu0 %v58
    %1357 = vmatpush.msra.mxu0 %v56
    %1358 = vmatpush.msra.mxu0 %v54
    %1359 = vmatpush.msra.mxu0 %v52
    %1360 = vmatpush.msra.mxu0 %v50
    %1361 = vmatpush.msra.mxu0 %v48
    %1362 = vmatpush.msra.mxu0 %v46
    %1363 = vmatmul.f32.gmra.mxu0 %v1325
    %v1364 = vpop.f32.mrf.mxu0
    %v1365 = vadd.f32 0.0, %v1364
    %1366 = vdwg.mxu0
    %v1367 = vadd.f32 %v1321, %v1345
    %v1368 = vadd.f32 %v1322, %v1365
    %v1369 = vxor.u32 %v1367, 2147483648
    %v1370 = vmul.f32 %v1369, 1.442695
    %v1371 = vpow.pop %v1370
    %v1372 = vadd.f32 %v1371, 1.0
    %v1373 = vrcp.pop %v1372
    %v1374 = vmul.f32 %v1372, %v1373
    %v1375 = vsub.f32 1.0, %v1374
    %v1376 = vmul.f32 %v1373, %v1375
    %v1377 = vadd.f32 %v1373, %v1376
    %vm1378 = vweird.f32 %v1372
    %vm1379 = vweird.f32 %v1373
    %vm1380 = vmor %vm1378, %vm1379
    %v1381 = vsel %vm1380, %v1373, %v1377
    %v1382 = vand.u32 2147483647, %v1372
    %vm1383 = vcmp.eq.f32.partialorder %v1382, 8.507059e+37
    %v1384 = vand.u32 %v1372, 2147483648
    %v1385 = vor.u32 1.1754944e-38, %v1384
    %v1386 = vsel %vm1383, %v1385, %v1381
    %v1387 = vmul.f32 1.0, %v1386
    %v1388 = vtanh.pop %v1367
    %v1389 = vxor.u32 %v1368, 2147483648
    %v1390 = vmul.f32 %v1389, 1.442695
    %v1391 = vpow.pop %v1390
    %v1392 = vadd.f32 %v1391, 1.0
    %v1393 = vrcp.pop %v1392
    %v1394 = vmul.f32 %v1392, %v1393
    %v1395 = vsub.f32 1.0, %v1394
    %v1396 = vmul.f32 %v1393, %v1395
    %v1397 = vadd.f32 %v1393, %v1396
    %vm1398 = vweird.f32 %v1392
    %vm1399 = vweird.f32 %v1393
    %vm1400 = vmor %vm1398, %vm1399
    %v1401 = vsel %vm1400, %v1393, %v1397
    %v1402 = vand.u32 2147483647, %v1392
    %vm1403 = vcmp.eq.f32.partialorder %v1402, 8.507059e+37
    %v1404 = vand.u32 %v1392, 2147483648
    %v1405 = vor.u32 1.1754944e-38, %v1404
    %v1406 = vsel %vm1403, %v1405, %v1401
    %v1407 = vmul.f32 1.0, %v1406
    %v1408 = vtanh.pop %v1368
    %v1409 = vld [vmem:[#allocation3] sm:$0xff]
    %1411 = vrot.lane.b32.xlu0 %v1409, 32
    %v1412 = vpop.permute.xlu0 %1411
    %v1414 = vmul.f32 %v1387, %v1412
    %1416 = vrot.lane.b32.xlu0 %v1388, 64
    %v1417 = vpop.permute.xlu0 %1416
    %v1419 = vmul.f32 %v1387, %v1417
    %1421 = vrot.lane.b32.xlu0 %v1419, 32
    %v1422 = vpop.permute.xlu0 %1421
    %v1424 = vadd.f32 %v1414, %v1422
    %v1425 = vld [vmem:[#allocation4] sm:$0xff]
    %1427 = vrot.lane.b32.xlu0 %v1425, 32
    %v1428 = vpop.permute.xlu0 %1427
    %v1430 = vmul.f32 %v1407, %v1428
    %1432 = vrot.lane.b32.xlu0 %v1408, 64
    %v1433 = vpop.permute.xlu0 %1432
    %v1435 = vmul.f32 %v1407, %v1433
    %1437 = vrot.lane.b32.xlu0 %v1435, 32
    %v1438 = vpop.permute.xlu0 %1437
    %v1440 = vadd.f32 %v1430, %v1438
    %v1441 = vtanh.pop %v1424
    %1443 = vrot.lane.b32.xlu0 %v1441, 64
    %v1444 = vpop.permute.xlu0 %1443
    %v1446 = vmul.f32 %v1387, %v1444
    %v1447 = vtanh.pop %v1440
    %1449 = vrot.lane.b32.xlu0 %v1447, 64
    %v1450 = vpop.permute.xlu0 %1449
    %v1452 = vmul.f32 %v1407, %v1450
    %1454 = vrot.lane.b32.xlu0 %v1424, 96
    %v1455 = vpop.permute.xlu0 %1454
    %1457 = vst.msk [vmem:[#allocation3] sm:$0xff] %vm198, %v1455
    %1459 = vrot.lane.b32.xlu0 %v1440, 96
    %v1460 = vpop.permute.xlu0 %1459
    %1462 = vst.msk [vmem:[#allocation4] sm:$0xff] %vm198, %v1460
    %1464 = vrot.lane.b32.xlu0 %v1446, 32
    %v1465 = vpop.permute.xlu0 %1464
    %1468 = vrot.lane.b32.xlu0 %v1452, 64
    %v1469 = vpop.permute.xlu0 %1468
    %v1471 = vsel %vm198, %v1465, %v1469
    %1472 = vst.msk [vmem:[#allocation2] sm:$0xff] %vm64, %v1471
    %s1473 = scalar_lea.vmem %s1, 56
    %v1474 = vld [vmem:[%s1473] sm:$0xff]
    %s1475 = scalar_lea.vmem %s2, 56
    %v1476 = vld [vmem:[%s1475] sm:$0xff]
    %vm1477 = vcmp.gt.f32.partialorder %v1474, 0.0
    %v1478 = vld [vmem:[#allocation5] sm:$0xff]
    %v1479 = vmax.f32 %v1478, %v1465
    %v1480 = vsel %vm1477, 1, 0
    %1481 = vset.pattern.permute.xlu0 0
    %1482 = vperm.xlu0 %1481, %v1480
    %v1483 = vpop.permute.xlu0 %1482
    %vm1484 = vcmp.eq.s32.totalorder %v1483, 1
    %v1485 = vsel %vm1484, %v1479, %v1478
    %1486 = vst.msk [vmem:[#allocation5] sm:$0xff] %vm198, %v1485
    %vm1487 = vcmp.gt.f32.partialorder %v1476, 0.0
    %v1488 = vld [vmem:[#allocation6] sm:$0xff]
    %1489 = vrot.lane.b32.xlu0 %v1452, 32
    %v1490 = vpop.permute.xlu0 %1489
    %v1492 = vmax.f32 %v1488, %v1490
    %v1493 = vsel %vm1487, 1, 0
    %1494 = vset.pattern.permute.xlu0 0
    %1495 = vperm.xlu0 %1494, %v1493
    %v1496 = vpop.permute.xlu0 %1495
    %vm1497 = vcmp.eq.s32.totalorder %v1496, 1
    %v1498 = vsel %vm1497, %v1492, %v1488
    %1499 = vst.msk [vmem:[#allocation6] sm:$0xff] %vm198, %v1498
    %v1500 = vld [vmem:[#allocation5] sm:$0xff]
    %v1501 = vld [vmem:[#allocation6] sm:$0xff]
    %1503 = vrot.lane.b32.xlu0 %v1501, 32
    %v1504 = vpop.permute.xlu0 %1503
    %v1506 = vsel %vm198, %v1500, %v1504
    %1507 = vst.msk [vmem:[#allocation10] sm:$0xff] %vm64, %v1506
    // Predicated region
    $region26: #{tpu_custom_call.1} parent=1 // pred_check
      _
    $region27: #{tpu_custom_call.1} parent=1 // pred_check_branch
      %1509 = sbr.rel (0) target = $region29
    $region28: #{tpu_custom_call.1} parent=1 // pred_region
      %1511 = vsyncadd [#allocation9], 0
      %s1513 = sshll.u32 [#allocation10], 4
      %s1514 = int_to_ptr.vmem [resolvable:$true] %s1513
      %s1515 = sshll.u32 %s4, 4
      %s1516 = int_to_ptr.hbm [resolvable:$true] %s1515
      %1518 = dma.vmem_to_hbm [thread:$0]  %s1514, 128, %s1516, [#allocation9]
    $region29: #{tpu_custom_call.1} parent=1 // pred_fallthru
      _
    // Predicated region
    $region30: #{tpu_custom_call.1} parent=1 // pred_check
      _
    $region31: #{tpu_custom_call.1} parent=1 // pred_check_branch
      %1520 = sbr.rel (0) target = $region33
    $region32: #{tpu_custom_call.1} parent=1 // pred_region
      %1522 = dma.done [#allocation9], 128
    $region33: #{tpu_custom_call.1} parent=1 // pred_fallthru
      _
    %1523 = vsyncpa [#allocation8], 1
    %1524 = vsyncpa [#allocation9], 1

</llo_original>
